<compile_context>
chip_gen: v7x
topology: tpu7x:2x2x1
jax: 0.10.0
libtpu: 0.0.40
codegen_flags: <defaults>
</compile_context>

<pallas_src>
import numpy as np
import jax
import jax.numpy as jnp
from jax import lax
from jax.experimental import pallas as pl
from jax.experimental.pallas import tpu as pltpu

NEG = -1.0e30  # finite stand-in for -inf (avoids NaN from inf - inf)


def _round_up(x, m):
    return pl.cdiv(x, m) * m


def _lse2(a, b):
    m = jnp.maximum(a, b)
    return m + jnp.log(jnp.exp(a - m) + jnp.exp(b - m))


def _lse3(a, b, c):
    m = jnp.maximum(jnp.maximum(a, b), c)
    return m + jnp.log(jnp.exp(a - m) + jnp.exp(b - m) + jnp.exp(c - m))


# ------------------ Kernel 1: ctc_lo projection + log_softmax ------------------

def _proj_logsoftmax_kernel(x_ref, w_ref, b_ref, o_ref):
    # bf16 x bf16 -> f32 accumulate on the MXU; softmax math in f32.
    logits = jnp.dot(x_ref[...], w_ref[...],
                     preferred_element_type=jnp.float32) + b_ref[...]
    m = jnp.max(logits, axis=-1, keepdims=True)
    lse = jnp.log(jnp.sum(jnp.exp(logits - m), axis=-1, keepdims=True)) + m
    o_ref[...] = logits - lse


def linear_log_softmax(x2d, w_pad, b_pad, tm=256):
    # TODO(synk): for very large vocabularies (D*Vp weight block exceeding VMEM)
    # the vocab reduction itself should be tiled; here Vp is held in one block.
    M, D = x2d.shape
    Vp = w_pad.shape[1]
    assert M % tm == 0
    return pl.pallas_call(
        _proj_logsoftmax_kernel,
        out_shape=jax.ShapeDtypeStruct((M, Vp), jnp.float32),
        grid=(M // tm,),
        in_specs=[
            pl.BlockSpec((tm, D), lambda i: (i, 0)),
            pl.BlockSpec((D, Vp), lambda i: (0, 0)),
            pl.BlockSpec((1, Vp), lambda i: (0, 0)),
        ],
        out_specs=pl.BlockSpec((tm, Vp), lambda i: (i, 0)),
        compiler_params=pltpu.CompilerParams(dimension_semantics=("parallel",)),
    )(x2d, w_pad, b_pad)


# ------------------ Kernel 2: CTC alpha recursion (forward loss) ------------------

def _ctc_alpha_kernel(emit_ref, skip_ref, fin_ref, loss_ref, alpha_ref):
    t_id = pl.program_id(1)
    tt = emit_ref.shape[0]
    bb, S = alpha_ref.shape
    lane = lax.broadcasted_iota(jnp.int32, (bb, S), 1)
    m1 = jnp.where(lane < 1, NEG, 0.0)   # kill wrap-around of shift-by-1
    m2 = skip_ref[...]                   # additive skip mask (0 / NEG), kills lanes 0,1 too

    def step(i, carry):
        a = alpha_ref[...]
        a1 = pltpu.roll(a, 1, 1) + m1
        a2 = pltpu.roll(a, 2, 1) + m2
        new = _lse3(a, a1, a2) + emit_ref[i]
        alpha_ref[...] = jnp.maximum(new, NEG)   # keep values bounded (no -inf/NaN)
        return carry

    @pl.when(t_id == 0)
    def _():
        # t = 0 init: alpha[0] = logp(blank), alpha[1] = logp(y_1), rest = -inf
        alpha_ref[...] = jnp.where(lane < 2, emit_ref[0], NEG)
        lax.fori_loop(1, tt, step, 0, unroll=True)

    @pl.when(t_id > 0)
    def _():
        lax.fori_loop(0, tt, step, 0, unroll=True)

    @pl.when(t_id == pl.num_programs(1) - 1)
    def _():
        # log-likelihood = logsumexp over the two final extended-label lanes.
        masked = alpha_ref[...] + fin_ref[...]
        mx = jnp.max(masked, axis=1, keepdims=True)
        tot = mx + jnp.log(jnp.sum(jnp.exp(masked - mx), axis=1, keepdims=True))
        loss = jnp.where(tot < 0.5 * NEG, 0.0, -tot)   # zero_infinity=True
        loss_ref[...] = jnp.broadcast_to(loss, loss_ref.shape)


def ctc_alpha_pallas(emit_tm, skip_add, final_add, bb=8, tt=8):
    Tp, Bp, S = emit_tm.shape
    assert Bp % bb == 0 and Tp % tt == 0
    out = pl.pallas_call(
        _ctc_alpha_kernel,
        out_shape=jax.ShapeDtypeStruct((Bp, S), jnp.float32),
        grid=(Bp // bb, Tp // tt),
        in_specs=[
            pl.BlockSpec((tt, bb, S), lambda b, t: (t, b, 0)),
            pl.BlockSpec((bb, S), lambda b, t: (b, 0)),
            pl.BlockSpec((bb, S), lambda b, t: (b, 0)),
        ],
        out_specs=pl.BlockSpec((bb, S), lambda b, t: (b, 0)),
        scratch_shapes=[pltpu.VMEM((bb, S), jnp.float32)],
        compiler_params=pltpu.CompilerParams(
            dimension_semantics=("parallel", "arbitrary")),
    )(emit_tm, skip_add, final_add)
    return out[:, 0]   # per-sample negative log-likelihood (padded batch)


# ------------------ glue: build CTC DP inputs from log-probs ------------------

def _build_ctc_inputs(log_probs, ys_pad, ys_lens, hlens, s_pad, bb=8, tt=8):
    # TODO(synk): fuse this label gather / transpose into a Pallas kernel
    # (one-hot matmul on the MXU) to avoid an extra HBM round trip at large vocab.
    B, T, V = log_probs.shape
    Lmax = ys_pad.shape[1]
    S = 2 * Lmax + 1
    assert S <= s_pad
    Bp = _round_up(B, bb)
    Tp = _round_up(T, tt)

    labels = jnp.maximum(ys_pad.astype(jnp.int32), 0)            # clamp pad ids
    z = jnp.zeros((B, S), jnp.int32).at[:, 1::2].set(labels)     # blank-interleaved

    # gather extended-label emissions: (B, T, S)
    z3 = jnp.broadcast_to(z[:, None, :], (B, T, S))
    emit = jnp.take_along_axis(log_probs, z3, axis=2)

    # "certain blank" row: 0 on blank lanes (< S), NEG elsewhere.  Used for
    # frames beyond hlen and for all batch/time padding: appending certain-blank
    # frames preserves the CTC likelihood exactly.
    sidx = jnp.arange(s_pad)
    blank_row = jnp.where((sidx % 2 == 0) & (sidx < S), 0.0, NEG)

    emit = jnp.pad(emit, ((0, 0), (0, 0), (0, s_pad - S)), constant_values=NEG)
    frozen = jnp.arange(T)[None, :, None] >= hlens.astype(jnp.int32)[:, None, None]
    emit = jnp.where(frozen, blank_row[None, None, :], emit)

    emit_full = jnp.broadcast_to(blank_row, (Bp, Tp, s_pad))
    emit_full = emit_full.at[:B, :T, :].set(emit)
    emit_tm = jnp.transpose(emit_full, (1, 0, 2))                # time-major (Tp, Bp, s_pad)

    # additive skip-transition mask: 0 where s-2 -> s allowed, NEG otherwise
    z_m2 = jnp.pad(z, ((0, 0), (2, 0)))[:, :S]
    sS = jnp.arange(S)[None, :]
    skip_ok = (sS >= 2) & (z != 0) & (z != z_m2)
    skip_add = jnp.where(skip_ok, 0.0, NEG)
    skip_add = jnp.pad(skip_add, ((0, Bp - B), (0, s_pad - S)), constant_values=NEG)

    # additive final-readout mask: 0 at lanes {2*ys_len, 2*ys_len - 1}
    spos = (2 * ys_lens.astype(jnp.int32))[:, None]
    lane = jnp.arange(s_pad)[None, :]
    final_ok = (lane == spos) | (lane == spos - 1)
    final_add = jnp.where(final_ok, 0.0, NEG)
    final_add = jnp.pad(final_add, ((0, Bp - B), (0, 0)), constant_values=NEG)

    return emit_tm, skip_add, final_add


# ------------------ CTC.forward equivalent ------------------

def ctc_forward(hs_pad, hlens, ys_pad, ys_lens, weight, bias):
    """Equivalent of wenet CTC.forward with dropout_rate=0.0 (identity),
    reduce=True, normalize_length=True, blank=0, zero_infinity=True."""
    B, Tmax, D = hs_pad.shape
    V = weight.shape[1]
    Vp = int(_round_up(V, 128))
    Lmax = ys_pad.shape[1]
    Sp = int(_round_up(2 * Lmax + 1, 128))
    tm, bb, tt = 256, 8, 8

    # kernel 1: projection + log_softmax on padded rows / padded vocab
    M = B * Tmax
    Mp = int(_round_up(M, tm))
    x2d = jnp.pad(hs_pad.reshape(M, D).astype(jnp.float32),
                  ((0, Mp - M), (0, 0))).astype(jnp.bfloat16)
    w_pad = jnp.zeros((D, Vp), jnp.float32).at[:, :V].set(weight).astype(jnp.bfloat16)
    b_pad = jnp.full((1, Vp), NEG, jnp.float32).at[0, :V].set(bias)
    log_probs = linear_log_softmax(x2d, w_pad, b_pad, tm=tm)[:M, :V]
    log_probs = log_probs.reshape(B, Tmax, V)

    # kernel 2: CTC alpha recursion
    emit_tm, skip_add, final_add = _build_ctc_inputs(
        log_probs, ys_pad, ys_lens, hlens, s_pad=Sp, bb=bb, tt=tt)
    per_sample = ctc_alpha_pallas(emit_tm, skip_add, final_add, bb=bb, tt=tt)[:B]

    denom = jnp.sum(ys_lens).astype(jnp.float32)   # normalize_length=True
    loss = jnp.sum(per_sample) / denom             # reduction='sum' then normalize
    return loss, per_sample, log_probs


# ------------------ pure-JAX reference (same math, f32 end-to-end) ------------------

def ref_ctc_forward(hs_pad, hlens, ys_pad, ys_lens, weight, bias):
    B, Tmax, D = hs_pad.shape
    V = weight.shape[1]
    logits = jnp.dot(hs_pad.reshape(B * Tmax, D), weight,
                     precision=lax.Precision.HIGHEST) + bias
    lp = jax.nn.log_softmax(logits, axis=-1).reshape(B, Tmax, V)

    Lmax = ys_pad.shape[1]
    S = 2 * Lmax + 1
    labels = jnp.maximum(ys_pad.astype(jnp.int32), 0)
    z = jnp.zeros((B, S), jnp.int32).at[:, 1::2].set(labels)
    z3 = jnp.broadcast_to(z[:, None, :], (B, Tmax, S))
    emit = jnp.transpose(jnp.take_along_axis(lp, z3, axis=2), (1, 0, 2))  # (T,B,S)

    z_m2 = jnp.pad(z, ((0, 0), (2, 0)))[:, :S]
    sidx = jnp.arange(S)[None, :]
    skip_ok = (sidx >= 2) & (z != 0) & (z != z_m2)
    lane = jnp.arange(S)[None, :]
    hlen2d = hlens.astype(jnp.int32)[:, None]
    spos = (2 * ys_lens.astype(jnp.int32))[:, None]

    alpha = jnp.where(lane < 2, emit[0], NEG)

    def step(alpha, xs):
        t, e = xs
        a1 = jnp.where(lane < 1, NEG, jnp.roll(alpha, 1, axis=1))
        a2 = jnp.where((lane < 2) | (~skip_ok), NEG, jnp.roll(alpha, 2, axis=1))
        new = _lse3(alpha, a1, a2) + e
        return jnp.where(t < hlen2d, new, alpha), None

    alpha, _ = lax.scan(step, alpha, (jnp.arange(1, Tmax), emit[1:]))
    v_last = jnp.max(jnp.where(lane == spos, alpha, NEG), axis=1)
    v_prev = jnp.max(jnp.where(lane == spos - 1, alpha, NEG), axis=1)
    tot = _lse2(v_last, v_prev)
    per_sample = jnp.where(tot < 0.5 * NEG, 0.0, -tot)
    return jnp.sum(per_sample) / jnp.sum(ys_lens).astype(jnp.float32), per_sample


if __name__ == "__main__":
    B, Tmax, D, V, Lmax = 2, 16, 32, 11, 4   # eprojs=32, odim=11 (blank=0)
    key = jax.random.PRNGKey(0)
    k1, k2, k3, k4 = jax.random.split(key, 4)

    hs_pad = jax.random.normal(k1, (B, Tmax, D), jnp.float32)
    hlens = jnp.array([16, 12], jnp.int32)
    ys_pad = jax.random.randint(k4, (B, Lmax), 1, V).astype(jnp.int32)
    ys_lens = jnp.array([4, 3], jnp.int32)

    # deterministic synthetic parameters for ctc_lo = Linear(eprojs, odim)
    weight = 0.05 * jax.random.normal(k2, (D, V), jnp.float32)   # (in, out) layout
    bias = 0.05 * jax.random.normal(k3, (V,), jnp.float32)

    loss, per_sample, log_probs = jax.jit(ctc_forward)(
        hs_pad, hlens, ys_pad, ys_lens, weight, bias)
    jax.block_until_ready(loss)

    ref_loss, ref_per_sample = ref_ctc_forward(
        hs_pad, hlens, ys_pad, ys_lens, weight, bias)

    assert bool(jnp.isfinite(loss)), "loss is not finite"
    np.testing.assert_allclose(np.asarray(per_sample), np.asarray(ref_per_sample),
                               rtol=1e-2, atol=5e-2)
    np.testing.assert_allclose(np.asarray(loss), np.asarray(ref_loss),
                               rtol=1e-2, atol=5e-2)

    print("KERNEL_OK")
</pallas_src>

<mosaic_0001>
module attributes {stable_mosaic.version = 11 : i64} {
  func.func @_proj_logsoftmax_kernel(%arg0: i32, %arg1: memref<256x32xbf16, #tpu.memory_space<vmem>>, %arg2: memref<32x128xbf16, #tpu.memory_space<vmem>>, %arg3: memref<1x128xf32, #tpu.memory_space<vmem>>, %arg4: memref<256x128xf32, #tpu.memory_space<vmem>>) attributes {dimension_semantics = [#tpu.dimension_semantics<parallel>], iteration_bounds = array<i64: 1>, scalar_prefetch = 0 : i64, scratch_operands = 0 : i64, tpu.core_type = #tpu.core_type<tc>, window_params = [{transform_indices = @transform_0, window_bounds = array<i64: 256, 32>}, {pipeline_mode = #tpu.pipeline_mode<synchronous>, transform_indices = @transform_1, window_bounds = array<i64: 32, 128>}, {pipeline_mode = #tpu.pipeline_mode<synchronous>, transform_indices = @transform_2, window_bounds = array<i64: 1, 128>}, {transform_indices = @transform_3, window_bounds = array<i64: 256, 128>}]} {
    %c0 = arith.constant 0 : index
    %c0_0 = arith.constant 0 : index
    %0 = vector.load %arg1[%c0, %c0_0] : memref<256x32xbf16, #tpu.memory_space<vmem>>, vector<256x32xbf16>
    %c0_1 = arith.constant 0 : index
    %c0_2 = arith.constant 0 : index
    %1 = vector.load %arg2[%c0_1, %c0_2] : memref<32x128xbf16, #tpu.memory_space<vmem>>, vector<32x128xbf16>
    %cst = arith.constant dense<0.000000e+00> : vector<256x128xf32>
    %2 = tpu.matmul %0, %1, %cst {dimension_numbers = #tpu.dot_dimension_numbers<[1], [0], [0], [1], [0, 0, 1, 1], [], []>} : vector<256x32xbf16>, vector<32x128xbf16>, vector<256x128xf32> -> vector<256x128xf32>
    %c0_3 = arith.constant 0 : index
    %c0_4 = arith.constant 0 : index
    %3 = vector.load %arg3[%c0_3, %c0_4] : memref<1x128xf32, #tpu.memory_space<vmem>>, vector<1x128xf32>
    %4 = vector.broadcast %3 : vector<1x128xf32> to vector<256x128xf32>
    %5 = arith.addf %2, %4 : vector<256x128xf32>
    %cst_5 = arith.constant dense<0xFF800000> : vector<256xf32>
    %6 = vector.multi_reduction <maximumf>, %5, %cst_5 [1] : vector<256x128xf32> to vector<256xf32>
    %7 = vector.shape_cast %6 : vector<256xf32> to vector<256x1xf32>
    %8 = vector.broadcast %7 : vector<256x1xf32> to vector<256x128xf32>
    %9 = arith.subf %5, %8 : vector<256x128xf32>
    %10 = math.exp %9 : vector<256x128xf32>
    %cst_6 = arith.constant dense<0.000000e+00> : vector<256xf32>
    %11 = vector.multi_reduction <add>, %10, %cst_6 [1] : vector<256x128xf32> to vector<256xf32>
    %12 = vector.shape_cast %11 : vector<256xf32> to vector<256x1xf32>
    %13 = math.log %12 : vector<256x1xf32>
    %14 = arith.addf %13, %7 : vector<256x1xf32>
    %15 = vector.broadcast %14 : vector<256x1xf32> to vector<256x128xf32>
    %16 = arith.subf %5, %15 : vector<256x128xf32>
    %c0_7 = arith.constant 0 : index
    %c0_8 = arith.constant 0 : index
    %17 = vector.load %arg4[%c0_7, %c0_8] : memref<256x128xf32, #tpu.memory_space<vmem>>, vector<256x128xf32>
    tpu.vector_store %arg4[%c0_7, %c0_8], %16 {strides = array<i32>} : memref<256x128xf32, #tpu.memory_space<vmem>>, vector<256x128xf32>,
    return
  }
  func.func @transform_0(%arg0: i32) -> (i32, i32) {
    %c0_i32 = arith.constant 0 : i32
    %c0_i32_0 = arith.constant 0 : i32
    return %arg0, %c0_i32 : i32, i32
  }
  func.func @transform_1(%arg0: i32) -> (i32, i32) {
    %c0_i32 = arith.constant 0 : i32
    %c0_i32_0 = arith.constant 0 : i32
    %c0_i32_1 = arith.constant 0 : i32
    return %c0_i32, %c0_i32_0 : i32, i32
  }
  func.func @transform_2(%arg0: i32) -> (i32, i32) {
    %c0_i32 = arith.constant 0 : i32
    %c0_i32_0 = arith.constant 0 : i32
    %c0_i32_1 = arith.constant 0 : i32
    return %c0_i32, %c0_i32_0 : i32, i32
  }
  func.func @transform_3(%arg0: i32) -> (i32, i32) {
    %c0_i32 = arith.constant 0 : i32
    %c0_i32_0 = arith.constant 0 : i32
    return %arg0, %c0_i32 : i32, i32
  }
}

module attributes {stable_mosaic.version = 11 : i64} {
  func.func @_ctc_alpha_kernel(%arg0: i32, %arg1: i32, %arg2: memref<8x8x128xf32, #tpu.memory_space<vmem>>, %arg3: memref<8x128xf32, #tpu.memory_space<vmem>>, %arg4: memref<8x128xf32, #tpu.memory_space<vmem>>, %arg5: memref<8x128xf32, #tpu.memory_space<vmem>>, %arg6: memref<8x128xf32, #tpu.memory_space<vmem>>) attributes {dimension_semantics = [#tpu.dimension_semantics<parallel>, #tpu.dimension_semantics<arbitrary>], iteration_bounds = array<i64: 1, 2>, scalar_prefetch = 0 : i64, scratch_operands = 1 : i64, tpu.core_type = #tpu.core_type<tc>, window_params = [{transform_indices = @transform_0, window_bounds = array<i64: 8, 8, 128>}, {transform_indices = @transform_1, window_bounds = array<i64: 8, 128>}, {transform_indices = @transform_2, window_bounds = array<i64: 8, 128>}, {transform_indices = @transform_3, window_bounds = array<i64: 8, 128>}]} {
    %0 = tpu.iota {dimensions = array<i32: 1>} : vector<8x128xi32>
    %c1_i32 = arith.constant 1 : i32
    %1 = vector.broadcast %c1_i32 : i32 to vector<8x128xi32>
    %2 = arith.cmpi slt, %0, %1 : vector<8x128xi32>
    %cst = arith.constant -1.000000e+30 : f32
    %cst_0 = arith.constant 0.000000e+00 : f32
    %3 = vector.broadcast %cst : f32 to vector<8x128xf32>
    %4 = vector.broadcast %cst_0 : f32 to vector<8x128xf32>
    %5 = arith.select %2, %3, %4 : vector<8x128xi1>, vector<8x128xf32>
    %c0 = arith.constant 0 : index
    %c0_1 = arith.constant 0 : index
    %6 = vector.load %arg3[%c0, %c0_1] : memref<8x128xf32, #tpu.memory_space<vmem>>, vector<8x128xf32>
    %7 = vector.shape_cast %6 : vector<8x128xf32> to vector<8x128xf32>
    %c0_i32 = arith.constant 0 : i32
    %8 = arith.cmpi eq, %arg1, %c0_i32 : i32
    %9 = arith.extui %8 : i1 to i32
    %c0_i32_2 = arith.constant 0 : i32
    %10 = arith.cmpi ne, %9, %c0_i32_2 : i32
    scf.if %10 {
      %c2_i32 = arith.constant 2 : i32
      %17 = vector.broadcast %c2_i32 : i32 to vector<8x128xi32>
      %18 = arith.cmpi slt, %0, %17 : vector<8x128xi32>
      %c0_7 = arith.constant 0 : index
      %c0_8 = arith.constant 0 : index
      %c0_9 = arith.constant 0 : index
      %19 = vector.load %arg2[%c0_7, %c0_8, %c0_9] : memref<8x8x128xf32, #tpu.memory_space<vmem>>, vector<1x8x128xf32>
      %20 = vector.shape_cast %19 : vector<1x8x128xf32> to vector<8x128xf32>
      %cst_10 = arith.constant -1.000000e+30 : f32
      %21 = vector.broadcast %cst_10 : f32 to vector<8x128xf32>
      %22 = arith.select %18, %20, %21 : vector<8x128xi1>, vector<8x128xf32>
      %c0_11 = arith.constant 0 : index
      %c0_12 = arith.constant 0 : index
      %23 = vector.load %arg6[%c0_11, %c0_12] : memref<8x128xf32, #tpu.memory_space<vmem>>, vector<8x128xf32>
      tpu.vector_store %arg6[%c0_11, %c0_12], %22 {strides = array<i32>} : memref<8x128xf32, #tpu.memory_space<vmem>>, vector<8x128xf32>,
      %c1_i32_13 = arith.constant 1 : i32
      %c0_14 = arith.constant 0 : index
      %c0_15 = arith.constant 0 : index
      %24 = vector.load %arg6[%c0_14, %c0_15] : memref<8x128xf32, #tpu.memory_space<vmem>>, vector<8x128xf32>
      %c1_i32_16 = arith.constant 1 : i32
      %25 = tpu.dynamic_rotate %24 by %c1_i32_16 dim 1 : vector<8x128xf32>, i32 -> vector<8x128xf32>
      %26 = arith.addf %25, %5 : vector<8x128xf32>
      %c2_i32_17 = arith.constant 2 : i32
      %27 = tpu.dynamic_rotate %24 by %c2_i32_17 dim 1 : vector<8x128xf32>, i32 -> vector<8x128xf32>
      %28 = arith.addf %27, %7 : vector<8x128xf32>
      %29 = arith.maximumf %24, %26 : vector<8x128xf32>
      %30 = arith.maximumf %29, %28 : vector<8x128xf32>
      %31 = arith.subf %24, %30 : vector<8x128xf32>
      %32 = math.exp %31 : vector<8x128xf32>
      %33 = arith.subf %26, %30 : vector<8x128xf32>
      %34 = math.exp %33 : vector<8x128xf32>
      %35 = arith.addf %32, %34 : vector<8x128xf32>
      %36 = arith.subf %28, %30 : vector<8x128xf32>
      %37 = math.exp %36 : vector<8x128xf32>
      %38 = arith.addf %35, %37 : vector<8x128xf32>
      %39 = math.log %38 : vector<8x128xf32>
      %40 = arith.addf %30, %39 : vector<8x128xf32>
      %41 = arith.index_cast %c1_i32_13 : i32 to index
      %c0_18 = arith.constant 0 : index
      %c0_19 = arith.constant 0 : index
      %42 = vector.load %arg2[%41, %c0_18, %c0_19] : memref<8x8x128xf32, #tpu.memory_space<vmem>>, vector<1x8x128xf32>
      %43 = vector.shape_cast %42 : vector<1x8x128xf32> to vector<8x128xf32>
      %44 = arith.addf %40, %43 : vector<8x128xf32>
      %cst_20 = arith.constant -1.000000e+30 : f32
      %45 = vector.broadcast %cst_20 : f32 to vector<8x128xf32>
      %46 = arith.maximumf %44, %45 : vector<8x128xf32>
      %c0_21 = arith.constant 0 : index
      %c0_22 = arith.constant 0 : index
      %47 = vector.load %arg6[%c0_21, %c0_22] : memref<8x128xf32, #tpu.memory_space<vmem>>, vector<8x128xf32>
      tpu.vector_store %arg6[%c0_21, %c0_22], %46 {strides = array<i32>} : memref<8x128xf32, #tpu.memory_space<vmem>>, vector<8x128xf32>,
      %c2_i32_23 = arith.constant 2 : i32
      %c0_24 = arith.constant 0 : index
      %c0_25 = arith.constant 0 : index
      %48 = vector.load %arg6[%c0_24, %c0_25] : memref<8x128xf32, #tpu.memory_space<vmem>>, vector<8x128xf32>
      %c1_i32_26 = arith.constant 1 : i32
      %49 = tpu.dynamic_rotate %48 by %c1_i32_26 dim 1 : vector<8x128xf32>, i32 -> vector<8x128xf32>
      %50 = arith.addf %49, %5 : vector<8x128xf32>
      %c2_i32_27 = arith.constant 2 : i32
      %51 = tpu.dynamic_rotate %48 by %c2_i32_27 dim 1 : vector<8x128xf32>, i32 -> vector<8x128xf32>
      %52 = arith.addf %51, %7 : vector<8x128xf32>
      %53 = arith.maximumf %48, %50 : vector<8x128xf32>
      %54 = arith.maximumf %53, %52 : vector<8x128xf32>
      %55 = arith.subf %48, %54 : vector<8x128xf32>
      %56 = math.exp %55 : vector<8x128xf32>
      %57 = arith.subf %50, %54 : vector<8x128xf32>
      %58 = math.exp %57 : vector<8x128xf32>
      %59 = arith.addf %56, %58 : vector<8x128xf32>
      %60 = arith.subf %52, %54 : vector<8x128xf32>
      %61 = math.exp %60 : vector<8x128xf32>
      %62 = arith.addf %59, %61 : vector<8x128xf32>
      %63 = math.log %62 : vector<8x128xf32>
      %64 = arith.addf %54, %63 : vector<8x128xf32>
      %65 = arith.index_cast %c2_i32_23 : i32 to index
      %c0_28 = arith.constant 0 : index
      %c0_29 = arith.constant 0 : index
      %66 = vector.load %arg2[%65, %c0_28, %c0_29] : memref<8x8x128xf32, #tpu.memory_space<vmem>>, vector<1x8x128xf32>
      %67 = vector.shape_cast %66 : vector<1x8x128xf32> to vector<8x128xf32>
      %68 = arith.addf %64, %67 : vector<8x128xf32>
      %cst_30 = arith.constant -1.000000e+30 : f32
      %69 = vector.broadcast %cst_30 : f32 to vector<8x128xf32>
      %70 = arith.maximumf %68, %69 : vector<8x128xf32>
      %c0_31 = arith.constant 0 : index
      %c0_32 = arith.constant 0 : index
      %71 = vector.load %arg6[%c0_31, %c0_32] : memref<8x128xf32, #tpu.memory_space<vmem>>, vector<8x128xf32>
      tpu.vector_store %arg6[%c0_31, %c0_32], %70 {strides = array<i32>} : memref<8x128xf32, #tpu.memory_space<vmem>>, vector<8x128xf32>,
      %c3_i32 = arith.constant 3 : i32
      %c0_33 = arith.constant 0 : index
      %c0_34 = arith.constant 0 : index
      %72 = vector.load %arg6[%c0_33, %c0_34] : memref<8x128xf32, #tpu.memory_space<vmem>>, vector<8x128xf32>
      %c1_i32_35 = arith.constant 1 : i32
      %73 = tpu.dynamic_rotate %72 by %c1_i32_35 dim 1 : vector<8x128xf32>, i32 -> vector<8x128xf32>
      %74 = arith.addf %73, %5 : vector<8x128xf32>
      %c2_i32_36 = arith.constant 2 : i32
      %75 = tpu.dynamic_rotate %72 by %c2_i32_36 dim 1 : vector<8x128xf32>, i32 -> vector<8x128xf32>
      %76 = arith.addf %75, %7 : vector<8x128xf32>
      %77 = arith.maximumf %72, %74 : vector<8x128xf32>
      %78 = arith.maximumf %77, %76 : vector<8x128xf32>
      %79 = arith.subf %72, %78 : vector<8x128xf32>
      %80 = math.exp %79 : vector<8x128xf32>
      %81 = arith.subf %74, %78 : vector<8x128xf32>
      %82 = math.exp %81 : vector<8x128xf32>
      %83 = arith.addf %80, %82 : vector<8x128xf32>
      %84 = arith.subf %76, %78 : vector<8x128xf32>
      %85 = math.exp %84 : vector<8x128xf32>
      %86 = arith.addf %83, %85 : vector<8x128xf32>
      %87 = math.log %86 : vector<8x128xf32>
      %88 = arith.addf %78, %87 : vector<8x128xf32>
      %89 = arith.index_cast %c3_i32 : i32 to index
      %c0_37 = arith.constant 0 : index
      %c0_38 = arith.constant 0 : index
      %90 = vector.load %arg2[%89, %c0_37, %c0_38] : memref<8x8x128xf32, #tpu.memory_space<vmem>>, vector<1x8x128xf32>
      %91 = vector.shape_cast %90 : vector<1x8x128xf32> to vector<8x128xf32>
      %92 = arith.addf %88, %91 : vector<8x128xf32>
      %cst_39 = arith.constant -1.000000e+30 : f32
      %93 = vector.broadcast %cst_39 : f32 to vector<8x128xf32>
      %94 = arith.maximumf %92, %93 : vector<8x128xf32>
      %c0_40 = arith.constant 0 : index
      %c0_41 = arith.constant 0 : index
      %95 = vector.load %arg6[%c0_40, %c0_41] : memref<8x128xf32, #tpu.memory_space<vmem>>, vector<8x128xf32>
      tpu.vector_store %arg6[%c0_40, %c0_41], %94 {strides = array<i32>} : memref<8x128xf32, #tpu.memory_space<vmem>>, vector<8x128xf32>,
      %c4_i32 = arith.constant 4 : i32
      %c0_42 = arith.constant 0 : index
      %c0_43 = arith.constant 0 : index
      %96 = vector.load %arg6[%c0_42, %c0_43] : memref<8x128xf32, #tpu.memory_space<vmem>>, vector<8x128xf32>
      %c1_i32_44 = arith.constant 1 : i32
      %97 = tpu.dynamic_rotate %96 by %c1_i32_44 dim 1 : vector<8x128xf32>, i32 -> vector<8x128xf32>
      %98 = arith.addf %97, %5 : vector<8x128xf32>
      %c2_i32_45 = arith.constant 2 : i32
      %99 = tpu.dynamic_rotate %96 by %c2_i32_45 dim 1 : vector<8x128xf32>, i32 -> vector<8x128xf32>
      %100 = arith.addf %99, %7 : vector<8x128xf32>
      %101 = arith.maximumf %96, %98 : vector<8x128xf32>
      %102 = arith.maximumf %101, %100 : vector<8x128xf32>
      %103 = arith.subf %96, %102 : vector<8x128xf32>
      %104 = math.exp %103 : vector<8x128xf32>
      %105 = arith.subf %98, %102 : vector<8x128xf32>
      %106 = math.exp %105 : vector<8x128xf32>
      %107 = arith.addf %104, %106 : vector<8x128xf32>
      %108 = arith.subf %100, %102 : vector<8x128xf32>
      %109 = math.exp %108 : vector<8x128xf32>
      %110 = arith.addf %107, %109 : vector<8x128xf32>
      %111 = math.log %110 : vector<8x128xf32>
      %112 = arith.addf %102, %111 : vector<8x128xf32>
      %113 = arith.index_cast %c4_i32 : i32 to index
      %c0_46 = arith.constant 0 : index
      %c0_47 = arith.constant 0 : index
      %114 = vector.load %arg2[%113, %c0_46, %c0_47] : memref<8x8x128xf32, #tpu.memory_space<vmem>>, vector<1x8x128xf32>
      %115 = vector.shape_cast %114 : vector<1x8x128xf32> to vector<8x128xf32>
      %116 = arith.addf %112, %115 : vector<8x128xf32>
      %cst_48 = arith.constant -1.000000e+30 : f32
      %117 = vector.broadcast %cst_48 : f32 to vector<8x128xf32>
      %118 = arith.maximumf %116, %117 : vector<8x128xf32>
      %c0_49 = arith.constant 0 : index
      %c0_50 = arith.constant 0 : index
      %119 = vector.load %arg6[%c0_49, %c0_50] : memref<8x128xf32, #tpu.memory_space<vmem>>, vector<8x128xf32>
      tpu.vector_store %arg6[%c0_49, %c0_50], %118 {strides = array<i32>} : memref<8x128xf32, #tpu.memory_space<vmem>>, vector<8x128xf32>,
      %c5_i32 = arith.constant 5 : i32
      %c0_51 = arith.constant 0 : index
      %c0_52 = arith.constant 0 : index
      %120 = vector.load %arg6[%c0_51, %c0_52] : memref<8x128xf32, #tpu.memory_space<vmem>>, vector<8x128xf32>
      %c1_i32_53 = arith.constant 1 : i32
      %121 = tpu.dynamic_rotate %120 by %c1_i32_53 dim 1 : vector<8x128xf32>, i32 -> vector<8x128xf32>
      %122 = arith.addf %121, %5 : vector<8x128xf32>
      %c2_i32_54 = arith.constant 2 : i32
      %123 = tpu.dynamic_rotate %120 by %c2_i32_54 dim 1 : vector<8x128xf32>, i32 -> vector<8x128xf32>
      %124 = arith.addf %123, %7 : vector<8x128xf32>
      %125 = arith.maximumf %120, %122 : vector<8x128xf32>
      %126 = arith.maximumf %125, %124 : vector<8x128xf32>
      %127 = arith.subf %120, %126 : vector<8x128xf32>
      %128 = math.exp %127 : vector<8x128xf32>
      %129 = arith.subf %122, %126 : vector<8x128xf32>
      %130 = math.exp %129 : vector<8x128xf32>
      %131 = arith.addf %128, %130 : vector<8x128xf32>
      %132 = arith.subf %124, %126 : vector<8x128xf32>
      %133 = math.exp %132 : vector<8x128xf32>
      %134 = arith.addf %131, %133 : vector<8x128xf32>
      %135 = math.log %134 : vector<8x128xf32>
      %136 = arith.addf %126, %135 : vector<8x128xf32>
      %137 = arith.index_cast %c5_i32 : i32 to index
      %c0_55 = arith.constant 0 : index
      %c0_56 = arith.constant 0 : index
      %138 = vector.load %arg2[%137, %c0_55, %c0_56] : memref<8x8x128xf32, #tpu.memory_space<vmem>>, vector<1x8x128xf32>
      %139 = vector.shape_cast %138 : vector<1x8x128xf32> to vector<8x128xf32>
      %140 = arith.addf %136, %139 : vector<8x128xf32>
      %cst_57 = arith.constant -1.000000e+30 : f32
      %141 = vector.broadcast %cst_57 : f32 to vector<8x128xf32>
      %142 = arith.maximumf %140, %141 : vector<8x128xf32>
      %c0_58 = arith.constant 0 : index
      %c0_59 = arith.constant 0 : index
      %143 = vector.load %arg6[%c0_58, %c0_59] : memref<8x128xf32, #tpu.memory_space<vmem>>, vector<8x128xf32>
      tpu.vector_store %arg6[%c0_58, %c0_59], %142 {strides = array<i32>} : memref<8x128xf32, #tpu.memory_space<vmem>>, vector<8x128xf32>,
      %c6_i32 = arith.constant 6 : i32
      %c0_60 = arith.constant 0 : index
      %c0_61 = arith.constant 0 : index
      %144 = vector.load %arg6[%c0_60, %c0_61] : memref<8x128xf32, #tpu.memory_space<vmem>>, vector<8x128xf32>
      %c1_i32_62 = arith.constant 1 : i32
      %145 = tpu.dynamic_rotate %144 by %c1_i32_62 dim 1 : vector<8x128xf32>, i32 -> vector<8x128xf32>
      %146 = arith.addf %145, %5 : vector<8x128xf32>
      %c2_i32_63 = arith.constant 2 : i32
      %147 = tpu.dynamic_rotate %144 by %c2_i32_63 dim 1 : vector<8x128xf32>, i32 -> vector<8x128xf32>
      %148 = arith.addf %147, %7 : vector<8x128xf32>
      %149 = arith.maximumf %144, %146 : vector<8x128xf32>
      %150 = arith.maximumf %149, %148 : vector<8x128xf32>
      %151 = arith.subf %144, %150 : vector<8x128xf32>
      %152 = math.exp %151 : vector<8x128xf32>
      %153 = arith.subf %146, %150 : vector<8x128xf32>
      %154 = math.exp %153 : vector<8x128xf32>
      %155 = arith.addf %152, %154 : vector<8x128xf32>
      %156 = arith.subf %148, %150 : vector<8x128xf32>
      %157 = math.exp %156 : vector<8x128xf32>
      %158 = arith.addf %155, %157 : vector<8x128xf32>
      %159 = math.log %158 : vector<8x128xf32>
      %160 = arith.addf %150, %159 : vector<8x128xf32>
      %161 = arith.index_cast %c6_i32 : i32 to index
      %c0_64 = arith.constant 0 : index
      %c0_65 = arith.constant 0 : index
      %162 = vector.load %arg2[%161, %c0_64, %c0_65] : memref<8x8x128xf32, #tpu.memory_space<vmem>>, vector<1x8x128xf32>
      %163 = vector.shape_cast %162 : vector<1x8x128xf32> to vector<8x128xf32>
      %164 = arith.addf %160, %163 : vector<8x128xf32>
      %cst_66 = arith.constant -1.000000e+30 : f32
      %165 = vector.broadcast %cst_66 : f32 to vector<8x128xf32>
      %166 = arith.maximumf %164, %165 : vector<8x128xf32>
      %c0_67 = arith.constant 0 : index
      %c0_68 = arith.constant 0 : index
      %167 = vector.load %arg6[%c0_67, %c0_68] : memref<8x128xf32, #tpu.memory_space<vmem>>, vector<8x128xf32>
      tpu.vector_store %arg6[%c0_67, %c0_68], %166 {strides = array<i32>} : memref<8x128xf32, #tpu.memory_space<vmem>>, vector<8x128xf32>,
      %c7_i32 = arith.constant 7 : i32
      %c0_69 = arith.constant 0 : index
      %c0_70 = arith.constant 0 : index
      %168 = vector.load %arg6[%c0_69, %c0_70] : memref<8x128xf32, #tpu.memory_space<vmem>>, vector<8x128xf32>
      %c1_i32_71 = arith.constant 1 : i32
      %169 = tpu.dynamic_rotate %168 by %c1_i32_71 dim 1 : vector<8x128xf32>, i32 -> vector<8x128xf32>
      %170 = arith.addf %169, %5 : vector<8x128xf32>
      %c2_i32_72 = arith.constant 2 : i32
      %171 = tpu.dynamic_rotate %168 by %c2_i32_72 dim 1 : vector<8x128xf32>, i32 -> vector<8x128xf32>
      %172 = arith.addf %171, %7 : vector<8x128xf32>
      %173 = arith.maximumf %168, %170 : vector<8x128xf32>
      %174 = arith.maximumf %173, %172 : vector<8x128xf32>
      %175 = arith.subf %168, %174 : vector<8x128xf32>
      %176 = math.exp %175 : vector<8x128xf32>
      %177 = arith.subf %170, %174 : vector<8x128xf32>
      %178 = math.exp %177 : vector<8x128xf32>
      %179 = arith.addf %176, %178 : vector<8x128xf32>
      %180 = arith.subf %172, %174 : vector<8x128xf32>
      %181 = math.exp %180 : vector<8x128xf32>
      %182 = arith.addf %179, %181 : vector<8x128xf32>
      %183 = math.log %182 : vector<8x128xf32>
      %184 = arith.addf %174, %183 : vector<8x128xf32>
      %185 = arith.index_cast %c7_i32 : i32 to index
      %c0_73 = arith.constant 0 : index
      %c0_74 = arith.constant 0 : index
      %186 = vector.load %arg2[%185, %c0_73, %c0_74] : memref<8x8x128xf32, #tpu.memory_space<vmem>>, vector<1x8x128xf32>
      %187 = vector.shape_cast %186 : vector<1x8x128xf32> to vector<8x128xf32>
      %188 = arith.addf %184, %187 : vector<8x128xf32>
      %cst_75 = arith.constant -1.000000e+30 : f32
      %189 = vector.broadcast %cst_75 : f32 to vector<8x128xf32>
      %190 = arith.maximumf %188, %189 : vector<8x128xf32>
      %c0_76 = arith.constant 0 : index
      %c0_77 = arith.constant 0 : index
      %191 = vector.load %arg6[%c0_76, %c0_77] : memref<8x128xf32, #tpu.memory_space<vmem>>, vector<8x128xf32>
      tpu.vector_store %arg6[%c0_76, %c0_77], %190 {strides = array<i32>} : memref<8x128xf32, #tpu.memory_space<vmem>>, vector<8x128xf32>,
      %c7_i32_78 = arith.constant 7 : i32
    } else {
    }
    %c0_i32_3 = arith.constant 0 : i32
    %11 = arith.cmpi sgt, %arg1, %c0_i32_3 : i32
    %12 = arith.extui %11 : i1 to i32
    %c0_i32_4 = arith.constant 0 : i32
    %13 = arith.cmpi ne, %12, %c0_i32_4 : i32
    scf.if %13 {
      %c0_i32_7 = arith.constant 0 : i32
      %c0_8 = arith.constant 0 : index
      %c0_9 = arith.constant 0 : index
      %17 = vector.load %arg6[%c0_8, %c0_9] : memref<8x128xf32, #tpu.memory_space<vmem>>, vector<8x128xf32>
      %c1_i32_10 = arith.constant 1 : i32
      %18 = tpu.dynamic_rotate %17 by %c1_i32_10 dim 1 : vector<8x128xf32>, i32 -> vector<8x128xf32>
      %19 = arith.addf %18, %5 : vector<8x128xf32>
      %c2_i32 = arith.constant 2 : i32
      %20 = tpu.dynamic_rotate %17 by %c2_i32 dim 1 : vector<8x128xf32>, i32 -> vector<8x128xf32>
      %21 = arith.addf %20, %7 : vector<8x128xf32>
      %22 = arith.maximumf %17, %19 : vector<8x128xf32>
      %23 = arith.maximumf %22, %21 : vector<8x128xf32>
      %24 = arith.subf %17, %23 : vector<8x128xf32>
      %25 = math.exp %24 : vector<8x128xf32>
      %26 = arith.subf %19, %23 : vector<8x128xf32>
      %27 = math.exp %26 : vector<8x128xf32>
      %28 = arith.addf %25, %27 : vector<8x128xf32>
      %29 = arith.subf %21, %23 : vector<8x128xf32>
      %30 = math.exp %29 : vector<8x128xf32>
      %31 = arith.addf %28, %30 : vector<8x128xf32>
      %32 = math.log %31 : vector<8x128xf32>
      %33 = arith.addf %23, %32 : vector<8x128xf32>
      %34 = arith.index_cast %c0_i32_7 : i32 to index
      %c0_11 = arith.constant 0 : index
      %c0_12 = arith.constant 0 : index
      %35 = vector.load %arg2[%34, %c0_11, %c0_12] : memref<8x8x128xf32, #tpu.memory_space<vmem>>, vector<1x8x128xf32>
      %36 = vector.shape_cast %35 : vector<1x8x128xf32> to vector<8x128xf32>
      %37 = arith.addf %33, %36 : vector<8x128xf32>
      %cst_13 = arith.constant -1.000000e+30 : f32
      %38 = vector.broadcast %cst_13 : f32 to vector<8x128xf32>
      %39 = arith.maximumf %37, %38 : vector<8x128xf32>
      %c0_14 = arith.constant 0 : index
      %c0_15 = arith.constant 0 : index
      %40 = vector.load %arg6[%c0_14, %c0_15] : memref<8x128xf32, #tpu.memory_space<vmem>>, vector<8x128xf32>
      tpu.vector_store %arg6[%c0_14, %c0_15], %39 {strides = array<i32>} : memref<8x128xf32, #tpu.memory_space<vmem>>, vector<8x128xf32>,
      %c1_i32_16 = arith.constant 1 : i32
      %c0_17 = arith.constant 0 : index
      %c0_18 = arith.constant 0 : index
      %41 = vector.load %arg6[%c0_17, %c0_18] : memref<8x128xf32, #tpu.memory_space<vmem>>, vector<8x128xf32>
      %c1_i32_19 = arith.constant 1 : i32
      %42 = tpu.dynamic_rotate %41 by %c1_i32_19 dim 1 : vector<8x128xf32>, i32 -> vector<8x128xf32>
      %43 = arith.addf %42, %5 : vector<8x128xf32>
      %c2_i32_20 = arith.constant 2 : i32
      %44 = tpu.dynamic_rotate %41 by %c2_i32_20 dim 1 : vector<8x128xf32>, i32 -> vector<8x128xf32>
      %45 = arith.addf %44, %7 : vector<8x128xf32>
      %46 = arith.maximumf %41, %43 : vector<8x128xf32>
      %47 = arith.maximumf %46, %45 : vector<8x128xf32>
      %48 = arith.subf %41, %47 : vector<8x128xf32>
      %49 = math.exp %48 : vector<8x128xf32>
      %50 = arith.subf %43, %47 : vector<8x128xf32>
      %51 = math.exp %50 : vector<8x128xf32>
      %52 = arith.addf %49, %51 : vector<8x128xf32>
      %53 = arith.subf %45, %47 : vector<8x128xf32>
      %54 = math.exp %53 : vector<8x128xf32>
      %55 = arith.addf %52, %54 : vector<8x128xf32>
      %56 = math.log %55 : vector<8x128xf32>
      %57 = arith.addf %47, %56 : vector<8x128xf32>
      %58 = arith.index_cast %c1_i32_16 : i32 to index
      %c0_21 = arith.constant 0 : index
      %c0_22 = arith.constant 0 : index
      %59 = vector.load %arg2[%58, %c0_21, %c0_22] : memref<8x8x128xf32, #tpu.memory_space<vmem>>, vector<1x8x128xf32>
      %60 = vector.shape_cast %59 : vector<1x8x128xf32> to vector<8x128xf32>
      %61 = arith.addf %57, %60 : vector<8x128xf32>
      %cst_23 = arith.constant -1.000000e+30 : f32
      %62 = vector.broadcast %cst_23 : f32 to vector<8x128xf32>
      %63 = arith.maximumf %61, %62 : vector<8x128xf32>
      %c0_24 = arith.constant 0 : index
      %c0_25 = arith.constant 0 : index
      %64 = vector.load %arg6[%c0_24, %c0_25] : memref<8x128xf32, #tpu.memory_space<vmem>>, vector<8x128xf32>
      tpu.vector_store %arg6[%c0_24, %c0_25], %63 {strides = array<i32>} : memref<8x128xf32, #tpu.memory_space<vmem>>, vector<8x128xf32>,
      %c2_i32_26 = arith.constant 2 : i32
      %c0_27 = arith.constant 0 : index
      %c0_28 = arith.constant 0 : index
      %65 = vector.load %arg6[%c0_27, %c0_28] : memref<8x128xf32, #tpu.memory_space<vmem>>, vector<8x128xf32>
      %c1_i32_29 = arith.constant 1 : i32
      %66 = tpu.dynamic_rotate %65 by %c1_i32_29 dim 1 : vector<8x128xf32>, i32 -> vector<8x128xf32>
      %67 = arith.addf %66, %5 : vector<8x128xf32>
      %c2_i32_30 = arith.constant 2 : i32
      %68 = tpu.dynamic_rotate %65 by %c2_i32_30 dim 1 : vector<8x128xf32>, i32 -> vector<8x128xf32>
      %69 = arith.addf %68, %7 : vector<8x128xf32>
      %70 = arith.maximumf %65, %67 : vector<8x128xf32>
      %71 = arith.maximumf %70, %69 : vector<8x128xf32>
      %72 = arith.subf %65, %71 : vector<8x128xf32>
      %73 = math.exp %72 : vector<8x128xf32>
      %74 = arith.subf %67, %71 : vector<8x128xf32>
      %75 = math.exp %74 : vector<8x128xf32>
      %76 = arith.addf %73, %75 : vector<8x128xf32>
      %77 = arith.subf %69, %71 : vector<8x128xf32>
      %78 = math.exp %77 : vector<8x128xf32>
      %79 = arith.addf %76, %78 : vector<8x128xf32>
      %80 = math.log %79 : vector<8x128xf32>
      %81 = arith.addf %71, %80 : vector<8x128xf32>
      %82 = arith.index_cast %c2_i32_26 : i32 to index
      %c0_31 = arith.constant 0 : index
      %c0_32 = arith.constant 0 : index
      %83 = vector.load %arg2[%82, %c0_31, %c0_32] : memref<8x8x128xf32, #tpu.memory_space<vmem>>, vector<1x8x128xf32>
      %84 = vector.shape_cast %83 : vector<1x8x128xf32> to vector<8x128xf32>
      %85 = arith.addf %81, %84 : vector<8x128xf32>
      %cst_33 = arith.constant -1.000000e+30 : f32
      %86 = vector.broadcast %cst_33 : f32 to vector<8x128xf32>
      %87 = arith.maximumf %85, %86 : vector<8x128xf32>
      %c0_34 = arith.constant 0 : index
      %c0_35 = arith.constant 0 : index
      %88 = vector.load %arg6[%c0_34, %c0_35] : memref<8x128xf32, #tpu.memory_space<vmem>>, vector<8x128xf32>
      tpu.vector_store %arg6[%c0_34, %c0_35], %87 {strides = array<i32>} : memref<8x128xf32, #tpu.memory_space<vmem>>, vector<8x128xf32>,
      %c3_i32 = arith.constant 3 : i32
      %c0_36 = arith.constant 0 : index
      %c0_37 = arith.constant 0 : index
      %89 = vector.load %arg6[%c0_36, %c0_37] : memref<8x128xf32, #tpu.memory_space<vmem>>, vector<8x128xf32>
      %c1_i32_38 = arith.constant 1 : i32
      %90 = tpu.dynamic_rotate %89 by %c1_i32_38 dim 1 : vector<8x128xf32>, i32 -> vector<8x128xf32>
      %91 = arith.addf %90, %5 : vector<8x128xf32>
      %c2_i32_39 = arith.constant 2 : i32
      %92 = tpu.dynamic_rotate %89 by %c2_i32_39 dim 1 : vector<8x128xf32>, i32 -> vector<8x128xf32>
      %93 = arith.addf %92, %7 : vector<8x128xf32>
      %94 = arith.maximumf %89, %91 : vector<8x128xf32>
      %95 = arith.maximumf %94, %93 : vector<8x128xf32>
      %96 = arith.subf %89, %95 : vector<8x128xf32>
      %97 = math.exp %96 : vector<8x128xf32>
      %98 = arith.subf %91, %95 : vector<8x128xf32>
      %99 = math.exp %98 : vector<8x128xf32>
      %100 = arith.addf %97, %99 : vector<8x128xf32>
      %101 = arith.subf %93, %95 : vector<8x128xf32>
      %102 = math.exp %101 : vector<8x128xf32>
      %103 = arith.addf %100, %102 : vector<8x128xf32>
      %104 = math.log %103 : vector<8x128xf32>
      %105 = arith.addf %95, %104 : vector<8x128xf32>
      %106 = arith.index_cast %c3_i32 : i32 to index
      %c0_40 = arith.constant 0 : index
      %c0_41 = arith.constant 0 : index
      %107 = vector.load %arg2[%106, %c0_40, %c0_41] : memref<8x8x128xf32, #tpu.memory_space<vmem>>, vector<1x8x128xf32>
      %108 = vector.shape_cast %107 : vector<1x8x128xf32> to vector<8x128xf32>
      %109 = arith.addf %105, %108 : vector<8x128xf32>
      %cst_42 = arith.constant -1.000000e+30 : f32
      %110 = vector.broadcast %cst_42 : f32 to vector<8x128xf32>
      %111 = arith.maximumf %109, %110 : vector<8x128xf32>
      %c0_43 = arith.constant 0 : index
      %c0_44 = arith.constant 0 : index
      %112 = vector.load %arg6[%c0_43, %c0_44] : memref<8x128xf32, #tpu.memory_space<vmem>>, vector<8x128xf32>
      tpu.vector_store %arg6[%c0_43, %c0_44], %111 {strides = array<i32>} : memref<8x128xf32, #tpu.memory_space<vmem>>, vector<8x128xf32>,
      %c4_i32 = arith.constant 4 : i32
      %c0_45 = arith.constant 0 : index
      %c0_46 = arith.constant 0 : index
      %113 = vector.load %arg6[%c0_45, %c0_46] : memref<8x128xf32, #tpu.memory_space<vmem>>, vector<8x128xf32>
      %c1_i32_47 = arith.constant 1 : i32
      %114 = tpu.dynamic_rotate %113 by %c1_i32_47 dim 1 : vector<8x128xf32>, i32 -> vector<8x128xf32>
      %115 = arith.addf %114, %5 : vector<8x128xf32>
      %c2_i32_48 = arith.constant 2 : i32
      %116 = tpu.dynamic_rotate %113 by %c2_i32_48 dim 1 : vector<8x128xf32>, i32 -> vector<8x128xf32>
      %117 = arith.addf %116, %7 : vector<8x128xf32>
      %118 = arith.maximumf %113, %115 : vector<8x128xf32>
      %119 = arith.maximumf %118, %117 : vector<8x128xf32>
      %120 = arith.subf %113, %119 : vector<8x128xf32>
      %121 = math.exp %120 : vector<8x128xf32>
      %122 = arith.subf %115, %119 : vector<8x128xf32>
      %123 = math.exp %122 : vector<8x128xf32>
      %124 = arith.addf %121, %123 : vector<8x128xf32>
      %125 = arith.subf %117, %119 : vector<8x128xf32>
      %126 = math.exp %125 : vector<8x128xf32>
      %127 = arith.addf %124, %126 : vector<8x128xf32>
      %128 = math.log %127 : vector<8x128xf32>
      %129 = arith.addf %119, %128 : vector<8x128xf32>
      %130 = arith.index_cast %c4_i32 : i32 to index
      %c0_49 = arith.constant 0 : index
      %c0_50 = arith.constant 0 : index
      %131 = vector.load %arg2[%130, %c0_49, %c0_50] : memref<8x8x128xf32, #tpu.memory_space<vmem>>, vector<1x8x128xf32>
      %132 = vector.shape_cast %131 : vector<1x8x128xf32> to vector<8x128xf32>
      %133 = arith.addf %129, %132 : vector<8x128xf32>
      %cst_51 = arith.constant -1.000000e+30 : f32
      %134 = vector.broadcast %cst_51 : f32 to vector<8x128xf32>
      %135 = arith.maximumf %133, %134 : vector<8x128xf32>
      %c0_52 = arith.constant 0 : index
      %c0_53 = arith.constant 0 : index
      %136 = vector.load %arg6[%c0_52, %c0_53] : memref<8x128xf32, #tpu.memory_space<vmem>>, vector<8x128xf32>
      tpu.vector_store %arg6[%c0_52, %c0_53], %135 {strides = array<i32>} : memref<8x128xf32, #tpu.memory_space<vmem>>, vector<8x128xf32>,
      %c5_i32 = arith.constant 5 : i32
      %c0_54 = arith.constant 0 : index
      %c0_55 = arith.constant 0 : index
      %137 = vector.load %arg6[%c0_54, %c0_55] : memref<8x128xf32, #tpu.memory_space<vmem>>, vector<8x128xf32>
      %c1_i32_56 = arith.constant 1 : i32
      %138 = tpu.dynamic_rotate %137 by %c1_i32_56 dim 1 : vector<8x128xf32>, i32 -> vector<8x128xf32>
      %139 = arith.addf %138, %5 : vector<8x128xf32>
      %c2_i32_57 = arith.constant 2 : i32
      %140 = tpu.dynamic_rotate %137 by %c2_i32_57 dim 1 : vector<8x128xf32>, i32 -> vector<8x128xf32>
      %141 = arith.addf %140, %7 : vector<8x128xf32>
      %142 = arith.maximumf %137, %139 : vector<8x128xf32>
      %143 = arith.maximumf %142, %141 : vector<8x128xf32>
      %144 = arith.subf %137, %143 : vector<8x128xf32>
      %145 = math.exp %144 : vector<8x128xf32>
      %146 = arith.subf %139, %143 : vector<8x128xf32>
      %147 = math.exp %146 : vector<8x128xf32>
      %148 = arith.addf %145, %147 : vector<8x128xf32>
      %149 = arith.subf %141, %143 : vector<8x128xf32>
      %150 = math.exp %149 : vector<8x128xf32>
      %151 = arith.addf %148, %150 : vector<8x128xf32>
      %152 = math.log %151 : vector<8x128xf32>
      %153 = arith.addf %143, %152 : vector<8x128xf32>
      %154 = arith.index_cast %c5_i32 : i32 to index
      %c0_58 = arith.constant 0 : index
      %c0_59 = arith.constant 0 : index
      %155 = vector.load %arg2[%154, %c0_58, %c0_59] : memref<8x8x128xf32, #tpu.memory_space<vmem>>, vector<1x8x128xf32>
      %156 = vector.shape_cast %155 : vector<1x8x128xf32> to vector<8x128xf32>
      %157 = arith.addf %153, %156 : vector<8x128xf32>
      %cst_60 = arith.constant -1.000000e+30 : f32
      %158 = vector.broadcast %cst_60 : f32 to vector<8x128xf32>
      %159 = arith.maximumf %157, %158 : vector<8x128xf32>
      %c0_61 = arith.constant 0 : index
      %c0_62 = arith.constant 0 : index
      %160 = vector.load %arg6[%c0_61, %c0_62] : memref<8x128xf32, #tpu.memory_space<vmem>>, vector<8x128xf32>
      tpu.vector_store %arg6[%c0_61, %c0_62], %159 {strides = array<i32>} : memref<8x128xf32, #tpu.memory_space<vmem>>, vector<8x128xf32>,
      %c6_i32 = arith.constant 6 : i32
      %c0_63 = arith.constant 0 : index
      %c0_64 = arith.constant 0 : index
      %161 = vector.load %arg6[%c0_63, %c0_64] : memref<8x128xf32, #tpu.memory_space<vmem>>, vector<8x128xf32>
      %c1_i32_65 = arith.constant 1 : i32
      %162 = tpu.dynamic_rotate %161 by %c1_i32_65 dim 1 : vector<8x128xf32>, i32 -> vector<8x128xf32>
      %163 = arith.addf %162, %5 : vector<8x128xf32>
      %c2_i32_66 = arith.constant 2 : i32
      %164 = tpu.dynamic_rotate %161 by %c2_i32_66 dim 1 : vector<8x128xf32>, i32 -> vector<8x128xf32>
      %165 = arith.addf %164, %7 : vector<8x128xf32>
      %166 = arith.maximumf %161, %163 : vector<8x128xf32>
      %167 = arith.maximumf %166, %165 : vector<8x128xf32>
      %168 = arith.subf %161, %167 : vector<8x128xf32>
      %169 = math.exp %168 : vector<8x128xf32>
      %170 = arith.subf %163, %167 : vector<8x128xf32>
      %171 = math.exp %170 : vector<8x128xf32>
      %172 = arith.addf %169, %171 : vector<8x128xf32>
      %173 = arith.subf %165, %167 : vector<8x128xf32>
      %174 = math.exp %173 : vector<8x128xf32>
      %175 = arith.addf %172, %174 : vector<8x128xf32>
      %176 = math.log %175 : vector<8x128xf32>
      %177 = arith.addf %167, %176 : vector<8x128xf32>
      %178 = arith.index_cast %c6_i32 : i32 to index
      %c0_67 = arith.constant 0 : index
      %c0_68 = arith.constant 0 : index
      %179 = vector.load %arg2[%178, %c0_67, %c0_68] : memref<8x8x128xf32, #tpu.memory_space<vmem>>, vector<1x8x128xf32>
      %180 = vector.shape_cast %179 : vector<1x8x128xf32> to vector<8x128xf32>
      %181 = arith.addf %177, %180 : vector<8x128xf32>
      %cst_69 = arith.constant -1.000000e+30 : f32
      %182 = vector.broadcast %cst_69 : f32 to vector<8x128xf32>
      %183 = arith.maximumf %181, %182 : vector<8x128xf32>
      %c0_70 = arith.constant 0 : index
      %c0_71 = arith.constant 0 : index
      %184 = vector.load %arg6[%c0_70, %c0_71] : memref<8x128xf32, #tpu.memory_space<vmem>>, vector<8x128xf32>
      tpu.vector_store %arg6[%c0_70, %c0_71], %183 {strides = array<i32>} : memref<8x128xf32, #tpu.memory_space<vmem>>, vector<8x128xf32>,
      %c7_i32 = arith.constant 7 : i32
      %c0_72 = arith.constant 0 : index
      %c0_73 = arith.constant 0 : index
      %185 = vector.load %arg6[%c0_72, %c0_73] : memref<8x128xf32, #tpu.memory_space<vmem>>, vector<8x128xf32>
      %c1_i32_74 = arith.constant 1 : i32
      %186 = tpu.dynamic_rotate %185 by %c1_i32_74 dim 1 : vector<8x128xf32>, i32 -> vector<8x128xf32>
      %187 = arith.addf %186, %5 : vector<8x128xf32>
      %c2_i32_75 = arith.constant 2 : i32
      %188 = tpu.dynamic_rotate %185 by %c2_i32_75 dim 1 : vector<8x128xf32>, i32 -> vector<8x128xf32>
      %189 = arith.addf %188, %7 : vector<8x128xf32>
      %190 = arith.maximumf %185, %187 : vector<8x128xf32>
      %191 = arith.maximumf %190, %189 : vector<8x128xf32>
      %192 = arith.subf %185, %191 : vector<8x128xf32>
      %193 = math.exp %192 : vector<8x128xf32>
      %194 = arith.subf %187, %191 : vector<8x128xf32>
      %195 = math.exp %194 : vector<8x128xf32>
      %196 = arith.addf %193, %195 : vector<8x128xf32>
      %197 = arith.subf %189, %191 : vector<8x128xf32>
      %198 = math.exp %197 : vector<8x128xf32>
      %199 = arith.addf %196, %198 : vector<8x128xf32>
      %200 = math.log %199 : vector<8x128xf32>
      %201 = arith.addf %191, %200 : vector<8x128xf32>
      %202 = arith.index_cast %c7_i32 : i32 to index
      %c0_76 = arith.constant 0 : index
      %c0_77 = arith.constant 0 : index
      %203 = vector.load %arg2[%202, %c0_76, %c0_77] : memref<8x8x128xf32, #tpu.memory_space<vmem>>, vector<1x8x128xf32>
      %204 = vector.shape_cast %203 : vector<1x8x128xf32> to vector<8x128xf32>
      %205 = arith.addf %201, %204 : vector<8x128xf32>
      %cst_78 = arith.constant -1.000000e+30 : f32
      %206 = vector.broadcast %cst_78 : f32 to vector<8x128xf32>
      %207 = arith.maximumf %205, %206 : vector<8x128xf32>
      %c0_79 = arith.constant 0 : index
      %c0_80 = arith.constant 0 : index
      %208 = vector.load %arg6[%c0_79, %c0_80] : memref<8x128xf32, #tpu.memory_space<vmem>>, vector<8x128xf32>
      tpu.vector_store %arg6[%c0_79, %c0_80], %207 {strides = array<i32>} : memref<8x128xf32, #tpu.memory_space<vmem>>, vector<8x128xf32>,
      %c8_i32 = arith.constant 8 : i32
    } else {
    }
    %c1_i32_5 = arith.constant 1 : i32
    %14 = arith.cmpi eq, %arg1, %c1_i32_5 : i32
    %15 = arith.extui %14 : i1 to i32
    %c0_i32_6 = arith.constant 0 : i32
    %16 = arith.cmpi ne, %15, %c0_i32_6 : i32
    scf.if %16 {
      %c0_7 = arith.constant 0 : index
      %c0_8 = arith.constant 0 : index
      %17 = vector.load %arg6[%c0_7, %c0_8] : memref<8x128xf32, #tpu.memory_space<vmem>>, vector<8x128xf32>
      %c0_9 = arith.constant 0 : index
      %c0_10 = arith.constant 0 : index
      %18 = vector.load %arg4[%c0_9, %c0_10] : memref<8x128xf32, #tpu.memory_space<vmem>>, vector<8x128xf32>
      %19 = vector.shape_cast %18 : vector<8x128xf32> to vector<8x128xf32>
      %20 = arith.addf %17, %19 : vector<8x128xf32>
      %cst_11 = arith.constant dense<0xFF800000> : vector<8xf32>
      %21 = vector.multi_reduction <maximumf>, %20, %cst_11 [1] : vector<8x128xf32> to vector<8xf32>
      %22 = vector.shape_cast %21 : vector<8xf32> to vector<8x1xf32>
      %23 = vector.broadcast %22 : vector<8x1xf32> to vector<8x128xf32>
      %24 = arith.subf %20, %23 : vector<8x128xf32>
      %25 = math.exp %24 : vector<8x128xf32>
      %cst_12 = arith.constant dense<0.000000e+00> : vector<8xf32>
      %26 = vector.multi_reduction <add>, %25, %cst_12 [1] : vector<8x128xf32> to vector<8xf32>
      %27 = vector.shape_cast %26 : vector<8xf32> to vector<8x1xf32>
      %28 = math.log %27 : vector<8x1xf32>
      %29 = arith.addf %22, %28 : vector<8x1xf32>
      %cst_13 = arith.constant -5.000000e+29 : f32
      %30 = vector.broadcast %cst_13 : f32 to vector<8x1xf32>
      %31 = arith.cmpf olt, %29, %30 : vector<8x1xf32>
      %cst_14 = arith.constant 0.000000e+00 : f32
      %32 = vector.broadcast %cst_14 : f32 to vector<8x1xf32>
      %33 = arith.subf %32, %29 : vector<8x1xf32>
      %cst_15 = arith.constant 0.000000e+00 : f32
      %34 = vector.broadcast %cst_15 : f32 to vector<8x1xf32>
      %35 = arith.select %31, %34, %33 : vector<8x1xi1>, vector<8x1xf32>
      %36 = vector.shape_cast %35 : vector<8x1xf32> to vector<8x1xf32>
      %37 = vector.broadcast %36 : vector<8x1xf32> to vector<8x128xf32>
      %c0_16 = arith.constant 0 : index
      %c0_17 = arith.constant 0 : index
      %38 = vector.load %arg5[%c0_16, %c0_17] : memref<8x128xf32, #tpu.memory_space<vmem>>, vector<8x128xf32>
      tpu.vector_store %arg5[%c0_16, %c0_17], %37 {strides = array<i32>} : memref<8x128xf32, #tpu.memory_space<vmem>>, vector<8x128xf32>,
    } else {
    }
    return
  }
  func.func @transform_0(%arg0: i32, %arg1: i32) -> (i32, i32, i32) {
    %c0_i32 = arith.constant 0 : i32
    %c0_i32_0 = arith.constant 0 : i32
    return %arg1, %arg0, %c0_i32 : i32, i32, i32
  }
  func.func @transform_1(%arg0: i32, %arg1: i32) -> (i32, i32) {
    %c0_i32 = arith.constant 0 : i32
    %c0_i32_0 = arith.constant 0 : i32
    return %arg0, %c0_i32 : i32, i32
  }
  func.func @transform_2(%arg0: i32, %arg1: i32) -> (i32, i32) {
    %c0_i32 = arith.constant 0 : i32
    %c0_i32_0 = arith.constant 0 : i32
    return %arg0, %c0_i32 : i32, i32
  }
  func.func @transform_3(%arg0: i32, %arg1: i32) -> (i32, i32) {
    %c0_i32 = arith.constant 0 : i32
    %c0_i32_0 = arith.constant 0 : i32
    return %arg0, %c0_i32 : i32, i32
  }
}

</mosaic_0001>

<llo_original>
// kernel: ctc_forward.2
$region0: #{ctc_forward.2}
  #allocation0 [shape = 'u32[]', space=smem, size = 0x4, offset = 0x4, fixed_abs, tag = 'smem constant byte address 0x4 - core index']
  #allocation1 [shape = 'u32[144,128]{1,0:T(1,128)}', space=vmem, size = 0x12000, scoped, tag = 'internal scratch']
  %s0 = inlined_call_operand.vmem [shape: bf16[256,32], index: 0, kind: input, shape index: {}]
  %s1 = inlined_call_operand.vmem [shape: bf16[32,128], index: 1, kind: input, shape index: {}]
  %s2 = inlined_call_operand.vmem [shape: f32[1,128], index: 2, kind: input, shape index: {}]
  %s3 = inlined_call_operand.vmem [shape: f32[256,128], index: 3, kind: output, shape index: {}]
  %s4 = sld [smem:[#allocation0]]
  $region22: #{ctc_forward.2} parent=0
    _
  %s6 = ssub.s32 1, %s4
  %s7 = scalar_select 0, %s6, %s4
  // Predicated region
  $region2: #{ctc_forward.2} parent=0 // pred_check
    _
  $region3: #{ctc_forward.2} parent=0 // pred_check_branch
    %9 = sbr.rel (0) target = $region5
  $region4: #{ctc_forward.2} parent=0 // pred_region
    _
  $region5: #{ctc_forward.2} parent=0 // pred_fallthru
    _
  // Predicated region
  $region6: #{ctc_forward.2} parent=0 // pred_check
    _
  $region7: #{ctc_forward.2} parent=0 // pred_check_branch
    %11 = sbr.rel (0) target = $region9
  $region8: #{ctc_forward.2} parent=0 // pred_region
    _
  $region9: #{ctc_forward.2} parent=0 // pred_fallthru
    _
  // Predicated region
  $region10: #{ctc_forward.2} parent=0 // pred_check
    _
  $region11: #{ctc_forward.2} parent=0 // pred_check_branch
    %13 = sbr.rel (0) target = $region13
  $region12: #{ctc_forward.2} parent=0 // pred_region
    _
  $region13: #{ctc_forward.2} parent=0 // pred_fallthru
    _
  %v15 = vld [vmem:[%s0] sm:$0xf]
  %v16 = vld [vmem:[%s0 + $0x4] sm:$0xf]
  %v17 = vld [vmem:[%s0 + $0x8] sm:$0xf]
  %v18 = vld [vmem:[%s0 + $0xc] sm:$0xf]
  %v19 = vld [vmem:[%s0 + $0x10] sm:$0xf]
  %v20 = vld [vmem:[%s0 + $0x14] sm:$0xf]
  %v21 = vld [vmem:[%s0 + $0x18] sm:$0xf]
  %v22 = vld [vmem:[%s0 + $0x1c] sm:$0xf]
  %v23 = vld [vmem:[%s0 + $0x20] sm:$0xf]
  %v24 = vld [vmem:[%s0 + $0x24] sm:$0xf]
  %v25 = vld [vmem:[%s0 + $0x28] sm:$0xf]
  %v26 = vld [vmem:[%s0 + $0x2c] sm:$0xf]
  %v27 = vld [vmem:[%s0 + $0x30] sm:$0xf]
  %v28 = vld [vmem:[%s0 + $0x34] sm:$0xf]
  %v29 = vld [vmem:[%s0 + $0x38] sm:$0xf]
  %v30 = vld [vmem:[%s0 + $0x3c] sm:$0xf]
  %v31 = vld [vmem:[%s0 + $0x40] sm:$0xf]
  %v32 = vld [vmem:[%s0 + $0x44] sm:$0xf]
  %v33 = vld [vmem:[%s0 + $0x48] sm:$0xf]
  %v34 = vld [vmem:[%s0 + $0x4c] sm:$0xf]
  %v35 = vld [vmem:[%s0 + $0x50] sm:$0xf]
  %v36 = vld [vmem:[%s0 + $0x54] sm:$0xf]
  %v37 = vld [vmem:[%s0 + $0x58] sm:$0xf]
  %v38 = vld [vmem:[%s0 + $0x5c] sm:$0xf]
  %v39 = vld [vmem:[%s0 + $0x60] sm:$0xf]
  %v40 = vld [vmem:[%s0 + $0x64] sm:$0xf]
  %v41 = vld [vmem:[%s0 + $0x68] sm:$0xf]
  %v42 = vld [vmem:[%s0 + $0x6c] sm:$0xf]
  %v43 = vld [vmem:[%s0 + $0x70] sm:$0xf]
  %v44 = vld [vmem:[%s0 + $0x74] sm:$0xf]
  %v45 = vld [vmem:[%s0 + $0x78] sm:$0xf]
  %v46 = vld [vmem:[%s0 + $0x7c] sm:$0xf]
  %v47 = vld [vmem:[%s1] sm:$0xf]
  %v48 = vld [vmem:[%s1 + $0x4] sm:$0xf]
  %v49 = vld [vmem:[%s1 + $0x8] sm:$0xf]
  %v50 = vld [vmem:[%s1 + $0xc] sm:$0xf]
  %v51 = vld [vmem:[%s2] sm:$0x1]
  %v53 = vlaneseq
  %v54 = vshrl.u32 %v53, 7
  %v55 = vsub.s32 0, %v54
  %v56 = vrot.slane %v51, %v55
  %v90 = vunpack.c.l.b16 %v15
  %v91 = vunpack.c.l.b16 %v16
  %v92 = vunpack.c.l.b16 %v17
  %v93 = vunpack.c.l.b16 %v18
  %v94 = vunpack.c.l.b16 %v19
  %v95 = vunpack.c.l.b16 %v20
  %v96 = vunpack.c.l.b16 %v21
  %v97 = vunpack.c.l.b16 %v22
  %v98 = vunpack.c.l.b16 %v23
  %v99 = vunpack.c.l.b16 %v24
  %v100 = vunpack.c.l.b16 %v25
  %v101 = vunpack.c.l.b16 %v26
  %v102 = vunpack.c.l.b16 %v27
  %v103 = vunpack.c.l.b16 %v28
  %v104 = vunpack.c.l.b16 %v29
  %v105 = vunpack.c.l.b16 %v30
  %v106 = vunpack.c.l.b16 %v31
  %v107 = vunpack.c.l.b16 %v32
  %v108 = vunpack.c.l.b16 %v33
  %v109 = vunpack.c.l.b16 %v34
  %v110 = vunpack.c.l.b16 %v35
  %v111 = vunpack.c.l.b16 %v36
  %v112 = vunpack.c.l.b16 %v37
  %v113 = vunpack.c.l.b16 %v38
  %v114 = vunpack.c.l.b16 %v39
  %v115 = vunpack.c.l.b16 %v40
  %v116 = vunpack.c.l.b16 %v41
  %v117 = vunpack.c.l.b16 %v42
  %v118 = vunpack.c.l.b16 %v43
  %v119 = vunpack.c.l.b16 %v44
  %v120 = vunpack.c.l.b16 %v45
  %v121 = vunpack.c.l.b16 %v46
  %v122 = vpack.c.b16 %v91, %v90
  %v123 = vpack.c.b16 %v93, %v92
  %v124 = vpack.c.b16 %v95, %v94
  %v125 = vpack.c.b16 %v97, %v96
  %v126 = vpack.c.b16 %v99, %v98
  %v127 = vpack.c.b16 %v101, %v100
  %v128 = vpack.c.b16 %v103, %v102
  %v129 = vpack.c.b16 %v105, %v104
  %v130 = vpack.c.b16 %v107, %v106
  %v131 = vpack.c.b16 %v109, %v108
  %v132 = vpack.c.b16 %v111, %v110
  %v133 = vpack.c.b16 %v113, %v112
  %v134 = vpack.c.b16 %v115, %v114
  %v135 = vpack.c.b16 %v117, %v116
  %v136 = vpack.c.b16 %v119, %v118
  %v137 = vpack.c.b16 %v121, %v120
  %v142 = vunpack.c.l.b16 %v47
  %v143 = vunpack.c.l.b16 %v48
  %v144 = vunpack.c.l.b16 %v49
  %v145 = vunpack.c.l.b16 %v50
  %v146 = vpack.c.b16 %v143, %v142
  %v147 = vpack.c.b16 %v145, %v144
  %vm150 = vcmask 261120
  %v152 = vsel %vm150, %v122, 0
  %v155 = vsel %vm150, %v123, 0
  %v158 = vsel %vm150, %v124, 0
  %v161 = vsel %vm150, %v125, 0
  %v164 = vsel %vm150, %v126, 0
  %v167 = vsel %vm150, %v127, 0
  %v170 = vsel %vm150, %v128, 0
  %v173 = vsel %vm150, %v129, 0
  %v176 = vsel %vm150, %v130, 0
  %v179 = vsel %vm150, %v131, 0
  %v182 = vsel %vm150, %v132, 0
  %v185 = vsel %vm150, %v133, 0
  %v188 = vsel %vm150, %v134, 0
  %v191 = vsel %vm150, %v135, 0
  %v194 = vsel %vm150, %v136, 0
  %v197 = vsel %vm150, %v137, 0
  %199 = vmatprep.subr.bf16.mxu0 0
  %200 = vmatpush1.bf16.msra.mxu0 %v146
  %201 = vmatprep.subr.bf16.mxu0 0
  %202 = vmatpush1.bf16.msra.mxu0 %v147
  %203 = vmatprep.subr.bf16.mxu0 0
  %204 = vmatpush1.bf16.msra.mxu0 0
  %205 = vmatprep.subr.bf16.mxu0 0
  %206 = vmatpush1.bf16.msra.mxu0 0
  %207 = vmatprep.subr.bf16.mxu0 0
  %208 = vmatpush1.bf16.msra.mxu0 0
  %209 = vmatprep.subr.bf16.mxu0 0
  %210 = vmatpush1.bf16.msra.mxu0 0
  %211 = vmatprep.subr.bf16.mxu0 0
  %212 = vmatpush1.bf16.msra.mxu0 0
  %213 = vmatprep.subr.bf16.mxu0 0
  %214 = vmatpush1.bf16.msra.mxu0 0
  %215 = vmatprep.subr.bf16.mxu0 0
  %216 = vmatpush1.bf16.msra.mxu0 0
  %217 = vmatprep.subr.bf16.mxu0 0
  %218 = vmatpush1.bf16.msra.mxu0 0
  %219 = vmatprep.subr.bf16.mxu0 0
  %220 = vmatpush1.bf16.msra.mxu0 0
  %221 = vmatprep.subr.bf16.mxu0 0
  %222 = vmatpush1.bf16.msra.mxu0 0
  %223 = vmatprep.subr.bf16.mxu0 0
  %224 = vmatpush1.bf16.msra.mxu0 0
  %225 = vmatprep.subr.bf16.mxu0 0
  %226 = vmatpush1.bf16.msra.mxu0 0
  %227 = vmatprep.subr.bf16.mxu0 0
  %228 = vmatpush1.bf16.msra.mxu0 0
  %229 = vmatprep.subr.bf16.mxu0 0
  %230 = vmatpush1.bf16.msra.mxu0 0
  %231 = vmatprep.mubr.bf16.mxu0 0
  %232 = vmatmul.mubr.bf16.gmra.mrb[0].mxu0 %v152
  %v233 = vpop.f32.mrb[0].mxu0
  %v234 = vadd.f32 %v56, %v233
  %v235 = vpop.f32.mrb[0].mxu0
  %v236 = vpop.f32.mrb[0].mxu0
  %v237 = vadd.f32 %v56, %v236
  %v238 = vpop.f32.mrb[0].mxu0
  %239 = vmatprep.mubr.bf16.mxu0 0
  %240 = vmatmul.mubr.bf16.gmra.mrb[0].mxu0 %v155
  %v241 = vpop.f32.mrb[0].mxu0
  %v242 = vadd.f32 %v56, %v241
  %v243 = vpop.f32.mrb[0].mxu0
  %v244 = vpop.f32.mrb[0].mxu0
  %v245 = vadd.f32 %v56, %v244
  %v246 = vpop.f32.mrb[0].mxu0
  %247 = vmatprep.mubr.bf16.mxu0 0
  %248 = vmatmul.mubr.bf16.gmra.mrb[0].mxu0 %v158
  %v249 = vpop.f32.mrb[0].mxu0
  %v250 = vadd.f32 %v56, %v249
  %v251 = vpop.f32.mrb[0].mxu0
  %v252 = vpop.f32.mrb[0].mxu0
  %v253 = vadd.f32 %v56, %v252
  %v254 = vpop.f32.mrb[0].mxu0
  %255 = vmatprep.mubr.bf16.mxu0 0
  %256 = vmatmul.mubr.bf16.gmra.mrb[0].mxu0 %v161
  %v257 = vpop.f32.mrb[0].mxu0
  %v258 = vadd.f32 %v56, %v257
  %v259 = vpop.f32.mrb[0].mxu0
  %v260 = vpop.f32.mrb[0].mxu0
  %v261 = vadd.f32 %v56, %v260
  %v262 = vpop.f32.mrb[0].mxu0
  %263 = vmatprep.mubr.bf16.mxu0 0
  %264 = vmatmul.mubr.bf16.gmra.mrb[0].mxu0 %v164
  %v265 = vpop.f32.mrb[0].mxu0
  %v266 = vadd.f32 %v56, %v265
  %v267 = vpop.f32.mrb[0].mxu0
  %v268 = vpop.f32.mrb[0].mxu0
  %v269 = vadd.f32 %v56, %v268
  %v270 = vpop.f32.mrb[0].mxu0
  %271 = vmatprep.mubr.bf16.mxu0 0
  %272 = vmatmul.mubr.bf16.gmra.mrb[0].mxu0 %v167
  %v273 = vpop.f32.mrb[0].mxu0
  %v274 = vadd.f32 %v56, %v273
  %v275 = vpop.f32.mrb[0].mxu0
  %v276 = vpop.f32.mrb[0].mxu0
  %v277 = vadd.f32 %v56, %v276
  %v278 = vpop.f32.mrb[0].mxu0
  %279 = vmatprep.mubr.bf16.mxu0 0
  %280 = vmatmul.mubr.bf16.gmra.mrb[0].mxu0 %v170
  %v281 = vpop.f32.mrb[0].mxu0
  %v282 = vadd.f32 %v56, %v281
  %v283 = vpop.f32.mrb[0].mxu0
  %v284 = vpop.f32.mrb[0].mxu0
  %v285 = vadd.f32 %v56, %v284
  %v286 = vpop.f32.mrb[0].mxu0
  %287 = vmatprep.mubr.bf16.mxu0 0
  %288 = vmatmul.mubr.bf16.gmra.mrb[0].mxu0 %v173
  %v289 = vpop.f32.mrb[0].mxu0
  %v290 = vadd.f32 %v56, %v289
  %v291 = vpop.f32.mrb[0].mxu0
  %v292 = vpop.f32.mrb[0].mxu0
  %v293 = vadd.f32 %v56, %v292
  %v294 = vpop.f32.mrb[0].mxu0
  %295 = vmatprep.mubr.bf16.mxu0 0
  %296 = vmatmul.mubr.bf16.gmra.mrb[0].mxu0 %v176
  %v297 = vpop.f32.mrb[0].mxu0
  %v298 = vadd.f32 %v56, %v297
  %v299 = vpop.f32.mrb[0].mxu0
  %v300 = vpop.f32.mrb[0].mxu0
  %v301 = vadd.f32 %v56, %v300
  %v302 = vpop.f32.mrb[0].mxu0
  %303 = vmatprep.mubr.bf16.mxu0 0
  %304 = vmatmul.mubr.bf16.gmra.mrb[0].mxu0 %v179
  %v305 = vpop.f32.mrb[0].mxu0
  %v306 = vadd.f32 %v56, %v305
  %v307 = vpop.f32.mrb[0].mxu0
  %v308 = vpop.f32.mrb[0].mxu0
  %v309 = vadd.f32 %v56, %v308
  %v310 = vpop.f32.mrb[0].mxu0
  %311 = vmatprep.mubr.bf16.mxu0 0
  %312 = vmatmul.mubr.bf16.gmra.mrb[0].mxu0 %v182
  %v313 = vpop.f32.mrb[0].mxu0
  %v314 = vadd.f32 %v56, %v313
  %v315 = vpop.f32.mrb[0].mxu0
  %v316 = vpop.f32.mrb[0].mxu0
  %v317 = vadd.f32 %v56, %v316
  %v318 = vpop.f32.mrb[0].mxu0
  %319 = vmatprep.mubr.bf16.mxu0 0
  %320 = vmatmul.mubr.bf16.gmra.mrb[0].mxu0 %v185
  %v321 = vpop.f32.mrb[0].mxu0
  %v322 = vadd.f32 %v56, %v321
  %v323 = vpop.f32.mrb[0].mxu0
  %v324 = vpop.f32.mrb[0].mxu0
  %v325 = vadd.f32 %v56, %v324
  %v326 = vpop.f32.mrb[0].mxu0
  %327 = vmatprep.mubr.bf16.mxu0 0
  %328 = vmatmul.mubr.bf16.gmra.mrb[0].mxu0 %v188
  %v329 = vpop.f32.mrb[0].mxu0
  %v330 = vadd.f32 %v56, %v329
  %v331 = vpop.f32.mrb[0].mxu0
  %v332 = vpop.f32.mrb[0].mxu0
  %v333 = vadd.f32 %v56, %v332
  %v334 = vpop.f32.mrb[0].mxu0
  %335 = vmatprep.mubr.bf16.mxu0 0
  %336 = vmatmul.mubr.bf16.gmra.mrb[0].mxu0 %v191
  %v337 = vpop.f32.mrb[0].mxu0
  %v338 = vadd.f32 %v56, %v337
  %v339 = vpop.f32.mrb[0].mxu0
  %v340 = vpop.f32.mrb[0].mxu0
  %v341 = vadd.f32 %v56, %v340
  %v342 = vpop.f32.mrb[0].mxu0
  %343 = vmatprep.mubr.bf16.mxu0 0
  %344 = vmatmul.mubr.bf16.gmra.mrb[0].mxu0 %v194
  %v345 = vpop.f32.mrb[0].mxu0
  %v346 = vadd.f32 %v56, %v345
  %v347 = vpop.f32.mrb[0].mxu0
  %v348 = vpop.f32.mrb[0].mxu0
  %v349 = vadd.f32 %v56, %v348
  %v350 = vpop.f32.mrb[0].mxu0
  %351 = vmatprep.mubr.bf16.mxu0 0
  %352 = vmatmul.mubr.bf16.gmra.mrb[0].mxu0 %v197
  %v353 = vpop.f32.mrb[0].mxu0
  %v354 = vadd.f32 %v56, %v353
  %v355 = vpop.f32.mrb[0].mxu0
  %v356 = vpop.f32.mrb[0].mxu0
  %v357 = vadd.f32 %v56, %v356
  %v358 = vpop.f32.mrb[0].mxu0
  %359 = vdwg.mxu0
  %360 = vmax.xlane.f32.xlu0 %v234
  %v361 = vpop.xlane.xlu0 %360
  %362 = vmax.xlane.f32.xlu0 %v237
  %v363 = vpop.xlane.xlu0 %362
  %364 = vmax.xlane.f32.xlu0 %v242
  %v365 = vpop.xlane.xlu0 %364
  %366 = vmax.xlane.f32.xlu0 %v245
  %v367 = vpop.xlane.xlu0 %366
  %368 = vmax.xlane.f32.xlu0 %v250
  %v369 = vpop.xlane.xlu0 %368
  %370 = vmax.xlane.f32.xlu0 %v253
  %v371 = vpop.xlane.xlu0 %370
  %372 = vmax.xlane.f32.xlu0 %v258
  %v373 = vpop.xlane.xlu0 %372
  %374 = vmax.xlane.f32.xlu0 %v261
  %v375 = vpop.xlane.xlu0 %374
  %376 = vmax.xlane.f32.xlu0 %v266
  %v377 = vpop.xlane.xlu0 %376
  %378 = vmax.xlane.f32.xlu0 %v269
  %v379 = vpop.xlane.xlu0 %378
  %380 = vmax.xlane.f32.xlu0 %v274
  %v381 = vpop.xlane.xlu0 %380
  %382 = vmax.xlane.f32.xlu0 %v277
  %v383 = vpop.xlane.xlu0 %382
  %384 = vmax.xlane.f32.xlu0 %v282
  %v385 = vpop.xlane.xlu0 %384
  %386 = vmax.xlane.f32.xlu0 %v285
  %v387 = vpop.xlane.xlu0 %386
  %388 = vmax.xlane.f32.xlu0 %v290
  %v389 = vpop.xlane.xlu0 %388
  %390 = vmax.xlane.f32.xlu0 %v293
  %v391 = vpop.xlane.xlu0 %390
  %392 = vmax.xlane.f32.xlu0 %v298
  %v393 = vpop.xlane.xlu0 %392
  %394 = vmax.xlane.f32.xlu0 %v301
  %v395 = vpop.xlane.xlu0 %394
  %396 = vmax.xlane.f32.xlu0 %v306
  %v397 = vpop.xlane.xlu0 %396
  %398 = vmax.xlane.f32.xlu0 %v309
  %v399 = vpop.xlane.xlu0 %398
  %400 = vmax.xlane.f32.xlu0 %v314
  %v401 = vpop.xlane.xlu0 %400
  %402 = vmax.xlane.f32.xlu0 %v317
  %v403 = vpop.xlane.xlu0 %402
  %404 = vmax.xlane.f32.xlu0 %v322
  %v405 = vpop.xlane.xlu0 %404
  %406 = vmax.xlane.f32.xlu0 %v325
  %v407 = vpop.xlane.xlu0 %406
  %408 = vmax.xlane.f32.xlu0 %v330
  %v409 = vpop.xlane.xlu0 %408
  %410 = vmax.xlane.f32.xlu0 %v333
  %v411 = vpop.xlane.xlu0 %410
  %412 = vmax.xlane.f32.xlu0 %v338
  %v413 = vpop.xlane.xlu0 %412
  %414 = vmax.xlane.f32.xlu0 %v341
  %v415 = vpop.xlane.xlu0 %414
  %416 = vmax.xlane.f32.xlu0 %v346
  %v417 = vpop.xlane.xlu0 %416
  %418 = vmax.xlane.f32.xlu0 %v349
  %v419 = vpop.xlane.xlu0 %418
  %420 = vmax.xlane.f32.xlu0 %v354
  %v421 = vpop.xlane.xlu0 %420
  %422 = vmax.xlane.f32.xlu0 %v357
  %v423 = vpop.xlane.xlu0 %422
  %v424 = vsub.f32 %v234, %v361
  %v425 = vsub.f32 %v237, %v363
  %v426 = vsub.f32 %v242, %v365
  %v427 = vsub.f32 %v245, %v367
  %v428 = vsub.f32 %v250, %v369
  %v429 = vsub.f32 %v253, %v371
  %v430 = vsub.f32 %v258, %v373
  %v431 = vsub.f32 %v261, %v375
  %v432 = vsub.f32 %v266, %v377
  %v433 = vsub.f32 %v269, %v379
  %v434 = vsub.f32 %v274, %v381
  %v435 = vsub.f32 %v277, %v383
  %v436 = vsub.f32 %v282, %v385
  %v437 = vsub.f32 %v285, %v387
  %v438 = vsub.f32 %v290, %v389
  %v439 = vsub.f32 %v293, %v391
  %v440 = vsub.f32 %v298, %v393
  %v441 = vsub.f32 %v301, %v395
  %v442 = vsub.f32 %v306, %v397
  %v443 = vsub.f32 %v309, %v399
  %v444 = vsub.f32 %v314, %v401
  %v445 = vsub.f32 %v317, %v403
  %v446 = vsub.f32 %v322, %v405
  %v447 = vsub.f32 %v325, %v407
  %v448 = vsub.f32 %v330, %v409
  %v449 = vsub.f32 %v333, %v411
  %v450 = vsub.f32 %v338, %v413
  %v451 = vsub.f32 %v341, %v415
  %v452 = vsub.f32 %v346, %v417
  %v453 = vsub.f32 %v349, %v419
  %v454 = vsub.f32 %v354, %v421
  %v455 = vsub.f32 %v357, %v423
  %v456 = vmul.f32 %v424, 1.442695
  %v457 = vpow.pop %v456
  %v458 = vmul.f32 %v425, 1.442695
  %v459 = vpow.pop %v458
  %v460 = vmul.f32 %v426, 1.442695
  %v461 = vpow.pop %v460
  %v462 = vmul.f32 %v427, 1.442695
  %v463 = vpow.pop %v462
  %v464 = vmul.f32 %v428, 1.442695
  %v465 = vpow.pop %v464
  %v466 = vmul.f32 %v429, 1.442695
  %v467 = vpow.pop %v466
  %v468 = vmul.f32 %v430, 1.442695
  %v469 = vpow.pop %v468
  %v470 = vmul.f32 %v431, 1.442695
  %v471 = vpow.pop %v470
  %v472 = vmul.f32 %v432, 1.442695
  %v473 = vpow.pop %v472
  %v474 = vmul.f32 %v433, 1.442695
  %v475 = vpow.pop %v474
  %v476 = vmul.f32 %v434, 1.442695
  %v477 = vpow.pop %v476
  %v478 = vmul.f32 %v435, 1.442695
  %v479 = vpow.pop %v478
  %v480 = vmul.f32 %v436, 1.442695
  %v481 = vpow.pop %v480
  %v482 = vmul.f32 %v437, 1.442695
  %v483 = vpow.pop %v482
  %v484 = vmul.f32 %v438, 1.442695
  %v485 = vpow.pop %v484
  %v486 = vmul.f32 %v439, 1.442695
  %v487 = vpow.pop %v486
  %v488 = vmul.f32 %v440, 1.442695
  %v489 = vpow.pop %v488
  %v490 = vmul.f32 %v441, 1.442695
  %v491 = vpow.pop %v490
  %v492 = vmul.f32 %v442, 1.442695
  %v493 = vpow.pop %v492
  %v494 = vmul.f32 %v443, 1.442695
  %v495 = vpow.pop %v494
  %v496 = vmul.f32 %v444, 1.442695
  %v497 = vpow.pop %v496
  %v498 = vmul.f32 %v445, 1.442695
  %v499 = vpow.pop %v498
  %v500 = vmul.f32 %v446, 1.442695
  %v501 = vpow.pop %v500
  %v502 = vmul.f32 %v447, 1.442695
  %v503 = vpow.pop %v502
  %v504 = vmul.f32 %v448, 1.442695
  %v505 = vpow.pop %v504
  %v506 = vmul.f32 %v449, 1.442695
  %v507 = vpow.pop %v506
  %v508 = vmul.f32 %v450, 1.442695
  %v509 = vpow.pop %v508
  %v510 = vmul.f32 %v451, 1.442695
  %v511 = vpow.pop %v510
  %v512 = vmul.f32 %v452, 1.442695
  %v513 = vpow.pop %v512
  %v514 = vmul.f32 %v453, 1.442695
  %v515 = vpow.pop %v514
  %v516 = vmul.f32 %v454, 1.442695
  %v517 = vpow.pop %v516
  %v518 = vmul.f32 %v455, 1.442695
  %v519 = vpow.pop %v518
  %520 = vadd.xlane.f32.xlu0 %v457
  %v521 = vpop.xlane.xlu0 %520
  %522 = vadd.xlane.f32.xlu0 %v459
  %v523 = vpop.xlane.xlu0 %522
  %524 = vadd.xlane.f32.xlu0 %v461
  %v525 = vpop.xlane.xlu0 %524
  %526 = vadd.xlane.f32.xlu0 %v463
  %v527 = vpop.xlane.xlu0 %526
  %528 = vadd.xlane.f32.xlu0 %v465
  %v529 = vpop.xlane.xlu0 %528
  %530 = vadd.xlane.f32.xlu0 %v467
  %v531 = vpop.xlane.xlu0 %530
  %532 = vadd.xlane.f32.xlu0 %v469
  %v533 = vpop.xlane.xlu0 %532
  %534 = vadd.xlane.f32.xlu0 %v471
  %v535 = vpop.xlane.xlu0 %534
  %536 = vadd.xlane.f32.xlu0 %v473
  %v537 = vpop.xlane.xlu0 %536
  %538 = vadd.xlane.f32.xlu0 %v475
  %v539 = vpop.xlane.xlu0 %538
  %540 = vadd.xlane.f32.xlu0 %v477
  %v541 = vpop.xlane.xlu0 %540
  %542 = vadd.xlane.f32.xlu0 %v479
  %v543 = vpop.xlane.xlu0 %542
  %544 = vadd.xlane.f32.xlu0 %v481
  %v545 = vpop.xlane.xlu0 %544
  %546 = vadd.xlane.f32.xlu0 %v483
  %v547 = vpop.xlane.xlu0 %546
  %548 = vadd.xlane.f32.xlu0 %v485
  %v549 = vpop.xlane.xlu0 %548
  %550 = vadd.xlane.f32.xlu0 %v487
  %v551 = vpop.xlane.xlu0 %550
  %552 = vadd.xlane.f32.xlu0 %v489
  %v553 = vpop.xlane.xlu0 %552
  %554 = vadd.xlane.f32.xlu0 %v491
  %v555 = vpop.xlane.xlu0 %554
  %556 = vadd.xlane.f32.xlu0 %v493
  %v557 = vpop.xlane.xlu0 %556
  %558 = vadd.xlane.f32.xlu0 %v495
  %v559 = vpop.xlane.xlu0 %558
  %560 = vadd.xlane.f32.xlu0 %v497
  %v561 = vpop.xlane.xlu0 %560
  %562 = vadd.xlane.f32.xlu0 %v499
  %v563 = vpop.xlane.xlu0 %562
  %564 = vadd.xlane.f32.xlu0 %v501
  %v565 = vpop.xlane.xlu0 %564
  %566 = vadd.xlane.f32.xlu0 %v503
  %v567 = vpop.xlane.xlu0 %566
  %568 = vadd.xlane.f32.xlu0 %v505
  %v569 = vpop.xlane.xlu0 %568
  %570 = vadd.xlane.f32.xlu0 %v507
  %v571 = vpop.xlane.xlu0 %570
  %572 = vadd.xlane.f32.xlu0 %v509
  %v573 = vpop.xlane.xlu0 %572
  %574 = vadd.xlane.f32.xlu0 %v511
  %v575 = vpop.xlane.xlu0 %574
  %576 = vadd.xlane.f32.xlu0 %v513
  %v577 = vpop.xlane.xlu0 %576
  %578 = vadd.xlane.f32.xlu0 %v515
  %v579 = vpop.xlane.xlu0 %578
  %580 = vadd.xlane.f32.xlu0 %v517
  %v581 = vpop.xlane.xlu0 %580
  %582 = vadd.xlane.f32.xlu0 %v519
  %v583 = vpop.xlane.xlu0 %582
  %v584 = vlog2.pop %v521
  %v585 = vmul.f32 %v584, 0.6931472
  %v586 = vlog2.pop %v523
  %v587 = vmul.f32 %v586, 0.6931472
  %v588 = vlog2.pop %v525
  %v589 = vmul.f32 %v588, 0.6931472
  %v590 = vlog2.pop %v527
  %v591 = vmul.f32 %v590, 0.6931472
  %v592 = vlog2.pop %v529
  %v593 = vmul.f32 %v592, 0.6931472
  %v594 = vlog2.pop %v531
  %v595 = vmul.f32 %v594, 0.6931472
  %v596 = vlog2.pop %v533
  %v597 = vmul.f32 %v596, 0.6931472
  %v598 = vlog2.pop %v535
  %v599 = vmul.f32 %v598, 0.6931472
  %v600 = vlog2.pop %v537
  %v601 = vmul.f32 %v600, 0.6931472
  %v602 = vlog2.pop %v539
  %v603 = vmul.f32 %v602, 0.6931472
  %v604 = vlog2.pop %v541
  %v605 = vmul.f32 %v604, 0.6931472
  %v606 = vlog2.pop %v543
  %v607 = vmul.f32 %v606, 0.6931472
  %v608 = vlog2.pop %v545
  %v609 = vmul.f32 %v608, 0.6931472
  %v610 = vlog2.pop %v547
  %v611 = vmul.f32 %v610, 0.6931472
  %v612 = vlog2.pop %v549
  %v613 = vmul.f32 %v612, 0.6931472
  %v614 = vlog2.pop %v551
  %v615 = vmul.f32 %v614, 0.6931472
  %v616 = vlog2.pop %v553
  %v617 = vmul.f32 %v616, 0.6931472
  %v618 = vlog2.pop %v555
  %v619 = vmul.f32 %v618, 0.6931472
  %v620 = vlog2.pop %v557
  %v621 = vmul.f32 %v620, 0.6931472
  %v622 = vlog2.pop %v559
  %v623 = vmul.f32 %v622, 0.6931472
  %v624 = vlog2.pop %v561
  %v625 = vmul.f32 %v624, 0.6931472
  %v626 = vlog2.pop %v563
  %v627 = vmul.f32 %v626, 0.6931472
  %v628 = vlog2.pop %v565
  %v629 = vmul.f32 %v628, 0.6931472
  %v630 = vlog2.pop %v567
  %v631 = vmul.f32 %v630, 0.6931472
  %v632 = vlog2.pop %v569
  %v633 = vmul.f32 %v632, 0.6931472
  %v634 = vlog2.pop %v571
  %v635 = vmul.f32 %v634, 0.6931472
  %v636 = vlog2.pop %v573
  %v637 = vmul.f32 %v636, 0.6931472
  %v638 = vlog2.pop %v575
  %v639 = vmul.f32 %v638, 0.6931472
  %v640 = vlog2.pop %v577
  %v641 = vmul.f32 %v640, 0.6931472
  %v642 = vlog2.pop %v579
  %v643 = vmul.f32 %v642, 0.6931472
  %v644 = vlog2.pop %v581
  %v645 = vmul.f32 %v644, 0.6931472
  %v646 = vlog2.pop %v583
  %v647 = vmul.f32 %v646, 0.6931472
  %v648 = vadd.f32 %v585, %v361
  %v649 = vadd.f32 %v587, %v363
  %v650 = vadd.f32 %v589, %v365
  %v651 = vadd.f32 %v591, %v367
  %v652 = vadd.f32 %v593, %v369
  %v653 = vadd.f32 %v595, %v371
  %v654 = vadd.f32 %v597, %v373
  %v655 = vadd.f32 %v599, %v375
  %v656 = vadd.f32 %v601, %v377
  %v657 = vadd.f32 %v603, %v379
  %v658 = vadd.f32 %v605, %v381
  %v659 = vadd.f32 %v607, %v383
  %v660 = vadd.f32 %v609, %v385
  %v661 = vadd.f32 %v611, %v387
  %v662 = vadd.f32 %v613, %v389
  %v663 = vadd.f32 %v615, %v391
  %v664 = vadd.f32 %v617, %v393
  %v665 = vadd.f32 %v619, %v395
  %v666 = vadd.f32 %v621, %v397
  %v667 = vadd.f32 %v623, %v399
  %v668 = vadd.f32 %v625, %v401
  %v669 = vadd.f32 %v627, %v403
  %v670 = vadd.f32 %v629, %v405
  %v671 = vadd.f32 %v631, %v407
  %v672 = vadd.f32 %v633, %v409
  %v673 = vadd.f32 %v635, %v411
  %v674 = vadd.f32 %v637, %v413
  %v675 = vadd.f32 %v639, %v415
  %v676 = vadd.f32 %v641, %v417
  %v677 = vadd.f32 %v643, %v419
  %v678 = vadd.f32 %v645, %v421
  %v679 = vadd.f32 %v647, %v423
  %v680 = vsub.f32 %v234, %v648
  %v681 = vsub.f32 %v237, %v649
  %v682 = vsub.f32 %v242, %v650
  %v683 = vsub.f32 %v245, %v651
  %v684 = vsub.f32 %v250, %v652
  %v685 = vsub.f32 %v253, %v653
  %v686 = vsub.f32 %v258, %v654
  %v687 = vsub.f32 %v261, %v655
  %v688 = vsub.f32 %v266, %v656
  %v689 = vsub.f32 %v269, %v657
  %v690 = vsub.f32 %v274, %v658
  %v691 = vsub.f32 %v277, %v659
  %v692 = vsub.f32 %v282, %v660
  %v693 = vsub.f32 %v285, %v661
  %v694 = vsub.f32 %v290, %v662
  %v695 = vsub.f32 %v293, %v663
  %v696 = vsub.f32 %v298, %v664
  %v697 = vsub.f32 %v301, %v665
  %v698 = vsub.f32 %v306, %v666
  %v699 = vsub.f32 %v309, %v667
  %v700 = vsub.f32 %v314, %v668
  %v701 = vsub.f32 %v317, %v669
  %v702 = vsub.f32 %v322, %v670
  %v703 = vsub.f32 %v325, %v671
  %v704 = vsub.f32 %v330, %v672
  %v705 = vsub.f32 %v333, %v673
  %v706 = vsub.f32 %v338, %v674
  %v707 = vsub.f32 %v341, %v675
  %v708 = vsub.f32 %v346, %v676
  %v709 = vsub.f32 %v349, %v677
  %v710 = vsub.f32 %v354, %v678
  %v711 = vsub.f32 %v357, %v679
  %712 = vst [vmem:[%s3] sm:$0xff] %v680
  %713 = vst [vmem:[%s3 + $0x8] sm:$0xff] %v681
  %714 = vst [vmem:[%s3 + $0x10] sm:$0xff] %v682
  %715 = vst [vmem:[%s3 + $0x18] sm:$0xff] %v683
  %716 = vst [vmem:[%s3 + $0x20] sm:$0xff] %v684
  %717 = vst [vmem:[%s3 + $0x28] sm:$0xff] %v685
  %718 = vst [vmem:[%s3 + $0x30] sm:$0xff] %v686
  %719 = vst [vmem:[%s3 + $0x38] sm:$0xff] %v687
  %720 = vst [vmem:[%s3 + $0x40] sm:$0xff] %v688
  %721 = vst [vmem:[%s3 + $0x48] sm:$0xff] %v689
  %722 = vst [vmem:[%s3 + $0x50] sm:$0xff] %v690
  %723 = vst [vmem:[%s3 + $0x58] sm:$0xff] %v691
  %724 = vst [vmem:[%s3 + $0x60] sm:$0xff] %v692
  %725 = vst [vmem:[%s3 + $0x68] sm:$0xff] %v693
  %726 = vst [vmem:[%s3 + $0x70] sm:$0xff] %v694
  %727 = vst [vmem:[%s3 + $0x78] sm:$0xff] %v695
  %728 = vst [vmem:[%s3 + $0x80] sm:$0xff] %v696
  %729 = vst [vmem:[%s3 + $0x88] sm:$0xff] %v697
  %730 = vst [vmem:[%s3 + $0x90] sm:$0xff] %v698
  %731 = vst [vmem:[%s3 + $0x98] sm:$0xff] %v699
  %732 = vst [vmem:[%s3 + $0xa0] sm:$0xff] %v700
  %733 = vst [vmem:[%s3 + $0xa8] sm:$0xff] %v701
  %734 = vst [vmem:[%s3 + $0xb0] sm:$0xff] %v702
  %735 = vst [vmem:[%s3 + $0xb8] sm:$0xff] %v703
  %736 = vst [vmem:[%s3 + $0xc0] sm:$0xff] %v704
  %737 = vst [vmem:[%s3 + $0xc8] sm:$0xff] %v705
  %738 = vst [vmem:[%s3 + $0xd0] sm:$0xff] %v706
  %739 = vst [vmem:[%s3 + $0xd8] sm:$0xff] %v707
  %740 = vst [vmem:[%s3 + $0xe0] sm:$0xff] %v708
  %741 = vst [vmem:[%s3 + $0xe8] sm:$0xff] %v709
  %742 = vst [vmem:[%s3 + $0xf0] sm:$0xff] %v710
  %743 = vst [vmem:[%s3 + $0xf8] sm:$0xff] %v711
  // Predicated region
  $region14: #{ctc_forward.2} parent=0 // pred_check
    _
  $region15: #{ctc_forward.2} parent=0 // pred_check_branch
    %745 = sbr.rel (0) target = $region17
  $region16: #{ctc_forward.2} parent=0 // pred_region
    _
  $region17: #{ctc_forward.2} parent=0 // pred_fallthru
    _
  // Predicated region
  $region18: #{ctc_forward.2} parent=0 // pred_check
    _
  $region19: #{ctc_forward.2} parent=0 // pred_check_branch
    %747 = sbr.rel (0) target = $region21
  $region20: #{ctc_forward.2} parent=0 // pred_region
    _
  $region21: #{ctc_forward.2} parent=0 // pred_fallthru
    _

// kernel: ctc_forward.3
$region0: #{ctc_forward.3}
  #allocation0 [shape = 'u32[]', space=smem, size = 0x4, offset = 0x4, fixed_abs, tag = 'smem constant byte address 0x4 - core index']
  #allocation1 [shape = 'u32[144,128]{1,0:T(1,128)}', space=vmem, size = 0x12000, scoped, tag = 'internal scratch']
  #allocation2 [shape = 'f32[8,128]{1,0:T(8,128)}', space=vmem, size = 0x1000, scoped, tag = 'scratch operand']
  %s0 = inlined_call_operand.vmem [shape: f32[16,8,128], index: 0, kind: input, shape index: {}]
  %s1 = inlined_call_operand.vmem [shape: f32[8,128], index: 1, kind: input, shape index: {}]
  %s2 = inlined_call_operand.vmem [shape: f32[8,128], index: 2, kind: input, shape index: {}]
  %s3 = inlined_call_operand.vmem [shape: f32[8,128], index: 3, kind: output, shape index: {}]
  %s4 = sld [smem:[#allocation0]]
  $region57: #{ctc_forward.3} parent=0
    _
  %s6 = ssub.s32 1, %s4
  %s7 = scalar_select 0, %s6, %s4
  loop: start=0, step=1, limit=4
  $region2: #{ctc_forward.3} parent=0 // loop_pre_header
    _
  $region3: #{ctc_forward.3} parent=0 // loop_header
    %s9 = sphi 0, %s13
    %p10 = scmp.ge.s32.totalorder %s9, 4
    %s16 = sphi 0, %s28
    %s17 = sphi 0, %s24
    %s18 = sphi 0, %s16
    %s19 = sphi 0, %s17
    %s20 = sphi 0, %s18
    %s21 = sphi 0, %s19
    %s33 = sphi 0, %s35
    %s36 = sphi 0, %s33
    %s37 = sphi 0, %s36
    %s53 = sphi 0, %s37
    %s59 = sphi 0, %s61
    %s62 = sphi 0, %s59
    %s63 = sphi 0, %s62
    %s79 = sphi 0, %s63
    %s85 = sphi 0, %s87
    %s88 = sphi 0, %s85
    %s89 = sphi 0, %s88
    %s105 = sphi 0, %s89
    %s111 = sphi 0, %s113
    %s114 = sphi 0, %s111
    %s115 = sphi 0, %s114
    %s131 = sphi 0, %s115
  $region4: #{ctc_forward.3} parent=0 // loop_header_branch
    %12 = sbr.rel (%p10) target = $region8
  $region5: #{ctc_forward.3} parent=0 // loop_body
    %s14 = ssub.s32 %s9, 1
    %s15 = ssub.s32 %s9, 2
    %s22 = sadd.s32 1, %s17
    %p23 = scmp.ge.s32.totalorder %s22, 2
    %s24 = scalar_select %p23, 0, %s22
    %s25 = sadd.s32 1, %s16
    %s26 = scalar_select %p23, %s25, %s16
    %p27 = scmp.ge.s32.totalorder %s26, 1
    %s28 = scalar_select %p27, 0, %s26
    %s29 = ssub.s32 %s17, %s24
    %s30 = ssub.s32 %s16, %s28
    %s31 = sor.u32 %s29, %s30
    %p32 = scmp.eq.s32.totalorder %s31, 0
    %s34 = sadd.s32 %s33, 1
    %s35 = scalar_select %p32, %s33, %s34
    %p38 = pneg %p32
    %p39 = scmp.eq.s32.totalorder %s9, 1
    %p40 = por %p38, %p39
    %p41 = scmp.ne.s32.totalorder %s33, %s36
    %p42 = scmp.eq.s32.totalorder %s9, 0
    %p43 = por %p41, %p42
    %p44 = scmp.ne.s32.totalorder %s33, %s36
    %p45 = scmp.eq.s32.totalorder %s14, 1
    %p46 = por %p44, %p45
    %p47 = scmp.ne.s32.totalorder %s36, %s37
    %p48 = scmp.eq.s32.totalorder %s14, 0
    %p49 = por %p47, %p48
    %p50 = scmp.ne.s32.totalorder %s36, %s37
    %p51 = scmp.eq.s32.totalorder %s15, 1
    %p52 = por %p50, %p51
    %p54 = scmp.ne.s32.totalorder %s37, %s53
    %p55 = scmp.eq.s32.totalorder %s15, 0
    %p56 = por %p54, %p55
    %s57 = ssub.s32 %s16, %s28
    %p58 = scmp.eq.s32.totalorder %s57, 0
    %s60 = sadd.s32 %s59, 1
    %s61 = scalar_select %p58, %s59, %s60
    %p64 = pneg %p58
    %p65 = scmp.eq.s32.totalorder %s9, 1
    %p66 = por %p64, %p65
    %p67 = scmp.ne.s32.totalorder %s59, %s62
    %p68 = scmp.eq.s32.totalorder %s9, 0
    %p69 = por %p67, %p68
    %p70 = scmp.ne.s32.totalorder %s59, %s62
    %p71 = scmp.eq.s32.totalorder %s14, 1
    %p72 = por %p70, %p71
    %p73 = scmp.ne.s32.totalorder %s62, %s63
    %p74 = scmp.eq.s32.totalorder %s14, 0
    %p75 = por %p73, %p74
    %p76 = scmp.ne.s32.totalorder %s62, %s63
    %p77 = scmp.eq.s32.totalorder %s15, 1
    %p78 = por %p76, %p77
    %p80 = scmp.ne.s32.totalorder %s63, %s79
    %p81 = scmp.eq.s32.totalorder %s15, 0
    %p82 = por %p80, %p81
    %s83 = ssub.s32 %s16, %s28
    %p84 = scmp.eq.s32.totalorder %s83, 0
    %s86 = sadd.s32 %s85, 1
    %s87 = scalar_select %p84, %s85, %s86
    %p90 = pneg %p84
    %p91 = scmp.eq.s32.totalorder %s9, 1
    %p92 = por %p90, %p91
    %p93 = scmp.ne.s32.totalorder %s85, %s88
    %p94 = scmp.eq.s32.totalorder %s9, 0
    %p95 = por %p93, %p94
    %p96 = scmp.ne.s32.totalorder %s85, %s88
    %p97 = scmp.eq.s32.totalorder %s14, 1
    %p98 = por %p96, %p97
    %p99 = scmp.ne.s32.totalorder %s88, %s89
    %p100 = scmp.eq.s32.totalorder %s14, 0
    %p101 = por %p99, %p100
    %p102 = scmp.ne.s32.totalorder %s88, %s89
    %p103 = scmp.eq.s32.totalorder %s15, 1
    %p104 = por %p102, %p103
    %p106 = scmp.ne.s32.totalorder %s89, %s105
    %p107 = scmp.eq.s32.totalorder %s15, 0
    %p108 = por %p106, %p107
    %s109 = ssub.s32 %s16, %s28
    %p110 = scmp.eq.s32.totalorder %s109, 0
    %s112 = sadd.s32 %s111, 1
    %s113 = scalar_select %p110, %s111, %s112
    %p116 = pneg %p110
    %p117 = scmp.eq.s32.totalorder %s9, 1
    %p118 = por %p116, %p117
    %p119 = scmp.ne.s32.totalorder %s111, %s114
    %p120 = scmp.eq.s32.totalorder %s9, 0
    %p121 = por %p119, %p120
    %p122 = scmp.ne.s32.totalorder %s111, %s114
    %p123 = scmp.eq.s32.totalorder %s14, 1
    %p124 = por %p122, %p123
    %p125 = scmp.ne.s32.totalorder %s114, %s115
    %p126 = scmp.eq.s32.totalorder %s14, 0
    %p127 = por %p125, %p126
    %p128 = scmp.ne.s32.totalorder %s114, %s115
    %p129 = scmp.eq.s32.totalorder %s15, 1
    %p130 = por %p128, %p129
    %p132 = scmp.ne.s32.totalorder %s115, %s131
    %p133 = scmp.eq.s32.totalorder %s15, 0
    %p134 = por %p132, %p133
    %p135 = scmp.le.s32.totalorder 1, %s9
    %p136 = scmp.lt.s32.totalorder %s9, 3
    %p137 = pnand %p135, %p136
    %p138 = pneg %p137
    // Predicated region
    $region9: #{ctc_forward.3} parent=5 // pred_check
      _
    $region10: #{ctc_forward.3} parent=5 // pred_check_branch
      %140 = sbr.rel (%p137) target = $region12
    $region11: #{ctc_forward.3} parent=5 // pred_region
      %s141 = ssub.s32 %s9, 1
      // Predicated region
      $region13: #{ctc_forward.3} parent=11 // pred_check
        %p142 = pneg %p75
      $region14: #{ctc_forward.3} parent=11 // pred_check_branch
        %144 = sbr.rel (%p142) target = $region16
      $region15: #{ctc_forward.3} parent=11 // pred_region
        %p145 = scmp.lt.s32.totalorder %s18, 0
        %s146 = scalar_select %p145, %s18, 0
        %s147 = smul.addr %s146, 8
        %s148 = scalar_lea.vmem %s1, %s147
      $region16: #{ctc_forward.3} parent=11 // pred_fallthru
        _
      // Predicated region
      $region17: #{ctc_forward.3} parent=11 // pred_check
        %p149 = pneg %p101
      $region18: #{ctc_forward.3} parent=11 // pred_check_branch
        %151 = sbr.rel (%p149) target = $region20
      $region19: #{ctc_forward.3} parent=11 // pred_region
        %p152 = scmp.lt.s32.totalorder %s18, 0
        %s153 = scalar_select %p152, %s18, 0
        %s154 = smul.addr %s153, 8
        %s155 = scalar_lea.vmem %s2, %s154
      $region20: #{ctc_forward.3} parent=11 // pred_fallthru
        _
    $region12: #{ctc_forward.3} parent=5 // pred_fallthru
      _
    %p156 = scmp.lt.s32.totalorder %s9, 2
    // Predicated region
    $region21: #{ctc_forward.3} parent=5 // pred_check
      %p157 = pneg %p156
    $region22: #{ctc_forward.3} parent=5 // pred_check_branch
      %159 = sbr.rel (%p157) target = $region24
    $region23: #{ctc_forward.3} parent=5 // pred_region
      // Predicated region
      $region25: #{ctc_forward.3} parent=23 // pred_check
        %p160 = pneg %p43
      $region26: #{ctc_forward.3} parent=23 // pred_check_branch
        %162 = sbr.rel (%p160) target = $region28
      $region27: #{ctc_forward.3} parent=23 // pred_region
        %s163 = smul.u32 8, %s17
        %p164 = scmp.lt.s32.totalorder %s163, 15
        %s165 = scalar_select %p164, %s163, 15
        %p166 = scmp.lt.s32.totalorder %s16, 0
        %s167 = scalar_select %p166, %s16, 0
        %s168 = sadd.s32 %s167, %s165
        %s169 = smul.addr %s168, 8
        %s170 = scalar_lea.vmem %s0, %s169
        %s171 = smul.u32 8, %s17
      $region28: #{ctc_forward.3} parent=23 // pred_fallthru
        _
    $region24: #{ctc_forward.3} parent=5 // pred_fallthru
      _
    %p172 = scmp.le.s32.totalorder 1, %s9
    %p173 = scmp.lt.s32.totalorder %s9, 3
    %p174 = pnand %p172, %p173
    %p175 = pneg %p174
    // Predicated region
    $region29: #{ctc_forward.3} parent=5 // pred_check
      _
    $region30: #{ctc_forward.3} parent=5 // pred_check_branch
      %177 = sbr.rel (%p174) target = $region32
    $region31: #{ctc_forward.3} parent=5 // pred_region
      %s178 = ssub.s32 %s9, 1
      %s179 = smul.u32 8, %s19
      %p180 = scmp.lt.s32.totalorder %s179, 15
      %s181 = scalar_select %p180, %s179, 15
      %p182 = scmp.lt.s32.totalorder %s18, 0
      %s183 = scalar_select %p182, %s18, 0
      %s184 = sadd.s32 %s183, %s181
      %s185 = smul.addr %s184, 8
      %s186 = scalar_lea.vmem %s0, %s185
      %p187 = pneg %p49
      %p188 = pneg %p46
      %p189 = scmp.lt.s32.totalorder %s18, 0
      %s190 = scalar_select %p189, %s18, 0
      %s191 = smul.addr %s190, 8
      %s192 = scalar_lea.vmem %s1, %s191
      %p193 = pneg %p75
      %p194 = pneg %p72
      %p195 = scmp.lt.s32.totalorder %s18, 0
      %s196 = scalar_select %p195, %s18, 0
      %s197 = smul.addr %s196, 8
      %s198 = scalar_lea.vmem %s2, %s197
      %p199 = pneg %p101
      %p200 = pneg %p98
      %p201 = pneg %p127
      %p202 = pneg %p124
      %p203 = scmp.lt.s32.totalorder %s18, 0
      %s204 = scalar_select %p203, %s18, 0
      %s205 = smul.addr %s204, 8
      %s206 = scalar_lea.vmem %s3, %s205
      %s207 = smul.u32 8, %s19
      %p208 = scmp.lt.s32.totalorder %s207, 15
      %s209 = scalar_select %p208, %s207, 15
      %p210 = scmp.lt.s32.totalorder %s18, 0
      %s211 = scalar_select %p210, %s18, 0
      %s212 = sadd.s32 %s211, %s209
      %s213 = smul.addr %s212, 8
      %s214 = scalar_lea.vmem %s0, %s213
      %s215 = smul.u32 8, %s19
      %p216 = scmp.lt.s32.totalorder %s18, 0
      %s217 = scalar_select %p216, %s18, 0
      %s218 = smul.addr %s217, 8
      %s219 = scalar_lea.vmem %s1, %s218
      %p220 = scmp.lt.s32.totalorder %s18, 0
      %s221 = scalar_select %p220, %s18, 0
      %s222 = smul.addr %s221, 8
      %s223 = scalar_lea.vmem %s2, %s222
      %p224 = scmp.lt.s32.totalorder %s18, 0
      %s225 = scalar_select %p224, %s18, 0
      %s226 = smul.addr %s225, 8
      %s227 = scalar_lea.vmem %s3, %s226
      %v228 = vlaneseq
      %v229 = vand.u32 %v228, 127
      %vm230 = vcmp.lt.s32.totalorder %v229, 1
      %v231 = vsel %vm230, -1e+30, 0.0
      %v232 = vld [vmem:[%s219] sm:$0xff]
      %p233 = scmp.eq.s32.totalorder %s19, 0
      // Predicated region
      $region33: #{ctc_forward.3} parent=31 // pred_check
        %p234 = pneg %p233
      $region34: #{ctc_forward.3} parent=31 // pred_check_branch
        %236 = sbr.rel (%p234) target = $region36
      $region35: #{ctc_forward.3} parent=31 // pred_region
        %vm237 = vcmp.lt.s32.totalorder %v229, 2
        %v238 = vld [vmem:[%s214] sm:$0xff]
        %v239 = vsel %vm237, %v238, -1e+30
        %240 = vst [vmem:[#allocation2] sm:$0xff] %v239
        %v241 = vld [vmem:[#allocation2] sm:$0xff]
        %242 = vrot.lane.b32.xlu0 %v241, 1
        %v243 = vpop.permute.xlu0 %242
        %v244 = vadd.f32 %v243, %v231
        %245 = vrot.lane.b32.xlu0 %v241, 2
        %v246 = vpop.permute.xlu0 %245
        %v247 = vadd.f32 %v246, %v232
        %v248 = vmax.f32 %v241, %v244
        %v249 = vmax.f32 %v248, %v247
        %v250 = vsub.f32 %v241, %v249
        %v251 = vmul.f32 %v250, 1.442695
        %v252 = vpow.pop %v251
        %v253 = vsub.f32 %v244, %v249
        %v254 = vmul.f32 %v253, 1.442695
        %v255 = vpow.pop %v254
        %v256 = vadd.f32 %v252, %v255
        %v257 = vsub.f32 %v247, %v249
        %v258 = vmul.f32 %v257, 1.442695
        %v259 = vpow.pop %v258
        %v260 = vadd.f32 %v256, %v259
        %v261 = vlog2.pop %v260
        %v262 = vmul.f32 %v261, 0.6931472
        %v263 = vadd.f32 %v249, %v262
        %s264 = scalar_lea.vmem %s214, 8
        %v265 = vld [vmem:[%s264] sm:$0xff]
        %v266 = vadd.f32 %v263, %v265
        %v267 = vmax.f32 %v266, -1e+30
        %268 = vst [vmem:[#allocation2] sm:$0xff] %v267
        %v269 = vld [vmem:[#allocation2] sm:$0xff]
        %270 = vrot.lane.b32.xlu0 %v269, 1
        %v271 = vpop.permute.xlu0 %270
        %v272 = vadd.f32 %v271, %v231
        %273 = vrot.lane.b32.xlu0 %v269, 2
        %v274 = vpop.permute.xlu0 %273
        %v275 = vadd.f32 %v274, %v232
        %v276 = vmax.f32 %v269, %v272
        %v277 = vmax.f32 %v276, %v275
        %v278 = vsub.f32 %v269, %v277
        %v279 = vmul.f32 %v278, 1.442695
        %v280 = vpow.pop %v279
        %v281 = vsub.f32 %v272, %v277
        %v282 = vmul.f32 %v281, 1.442695
        %v283 = vpow.pop %v282
        %v284 = vadd.f32 %v280, %v283
        %v285 = vsub.f32 %v275, %v277
        %v286 = vmul.f32 %v285, 1.442695
        %v287 = vpow.pop %v286
        %v288 = vadd.f32 %v284, %v287
        %v289 = vlog2.pop %v288
        %v290 = vmul.f32 %v289, 0.6931472
        %v291 = vadd.f32 %v277, %v290
        %s292 = scalar_lea.vmem %s214, 16
        %v293 = vld [vmem:[%s292] sm:$0xff]
        %v294 = vadd.f32 %v291, %v293
        %v295 = vmax.f32 %v294, -1e+30
        %296 = vst [vmem:[#allocation2] sm:$0xff] %v295
        %v297 = vld [vmem:[#allocation2] sm:$0xff]
        %298 = vrot.lane.b32.xlu0 %v297, 1
        %v299 = vpop.permute.xlu0 %298
        %v300 = vadd.f32 %v299, %v231
        %301 = vrot.lane.b32.xlu0 %v297, 2
        %v302 = vpop.permute.xlu0 %301
        %v303 = vadd.f32 %v302, %v232
        %v304 = vmax.f32 %v297, %v300
        %v305 = vmax.f32 %v304, %v303
        %v306 = vsub.f32 %v297, %v305
        %v307 = vmul.f32 %v306, 1.442695
        %v308 = vpow.pop %v307
        %v309 = vsub.f32 %v300, %v305
        %v310 = vmul.f32 %v309, 1.442695
        %v311 = vpow.pop %v310
        %v312 = vadd.f32 %v308, %v311
        %v313 = vsub.f32 %v303, %v305
        %v314 = vmul.f32 %v313, 1.442695
        %v315 = vpow.pop %v314
        %v316 = vadd.f32 %v312, %v315
        %v317 = vlog2.pop %v316
        %v318 = vmul.f32 %v317, 0.6931472
        %v319 = vadd.f32 %v305, %v318
        %s320 = scalar_lea.vmem %s214, 24
        %v321 = vld [vmem:[%s320] sm:$0xff]
        %v322 = vadd.f32 %v319, %v321
        %v323 = vmax.f32 %v322, -1e+30
        %324 = vst [vmem:[#allocation2] sm:$0xff] %v323
        %v325 = vld [vmem:[#allocation2] sm:$0xff]
        %326 = vrot.lane.b32.xlu0 %v325, 1
        %v327 = vpop.permute.xlu0 %326
        %v328 = vadd.f32 %v327, %v231
        %329 = vrot.lane.b32.xlu0 %v325, 2
        %v330 = vpop.permute.xlu0 %329
        %v331 = vadd.f32 %v330, %v232
        %v332 = vmax.f32 %v325, %v328
        %v333 = vmax.f32 %v332, %v331
        %v334 = vsub.f32 %v325, %v333
        %v335 = vmul.f32 %v334, 1.442695
        %v336 = vpow.pop %v335
        %v337 = vsub.f32 %v328, %v333
        %v338 = vmul.f32 %v337, 1.442695
        %v339 = vpow.pop %v338
        %v340 = vadd.f32 %v336, %v339
        %v341 = vsub.f32 %v331, %v333
        %v342 = vmul.f32 %v341, 1.442695
        %v343 = vpow.pop %v342
        %v344 = vadd.f32 %v340, %v343
        %v345 = vlog2.pop %v344
        %v346 = vmul.f32 %v345, 0.6931472
        %v347 = vadd.f32 %v333, %v346
        %s348 = scalar_lea.vmem %s214, 32
        %v349 = vld [vmem:[%s348] sm:$0xff]
        %v350 = vadd.f32 %v347, %v349
        %v351 = vmax.f32 %v350, -1e+30
        %352 = vst [vmem:[#allocation2] sm:$0xff] %v351
        %v353 = vld [vmem:[#allocation2] sm:$0xff]
        %354 = vrot.lane.b32.xlu0 %v353, 1
        %v355 = vpop.permute.xlu0 %354
        %v356 = vadd.f32 %v355, %v231
        %357 = vrot.lane.b32.xlu0 %v353, 2
        %v358 = vpop.permute.xlu0 %357
        %v359 = vadd.f32 %v358, %v232
        %v360 = vmax.f32 %v353, %v356
        %v361 = vmax.f32 %v360, %v359
        %v362 = vsub.f32 %v353, %v361
        %v363 = vmul.f32 %v362, 1.442695
        %v364 = vpow.pop %v363
        %v365 = vsub.f32 %v356, %v361
        %v366 = vmul.f32 %v365, 1.442695
        %v367 = vpow.pop %v366
        %v368 = vadd.f32 %v364, %v367
        %v369 = vsub.f32 %v359, %v361
        %v370 = vmul.f32 %v369, 1.442695
        %v371 = vpow.pop %v370
        %v372 = vadd.f32 %v368, %v371
        %v373 = vlog2.pop %v372
        %v374 = vmul.f32 %v373, 0.6931472
        %v375 = vadd.f32 %v361, %v374
        %s376 = scalar_lea.vmem %s214, 40
        %v377 = vld [vmem:[%s376] sm:$0xff]
        %v378 = vadd.f32 %v375, %v377
        %v379 = vmax.f32 %v378, -1e+30
        %380 = vst [vmem:[#allocation2] sm:$0xff] %v379
        %v381 = vld [vmem:[#allocation2] sm:$0xff]
        %382 = vrot.lane.b32.xlu0 %v381, 1
        %v383 = vpop.permute.xlu0 %382
        %v384 = vadd.f32 %v383, %v231
        %385 = vrot.lane.b32.xlu0 %v381, 2
        %v386 = vpop.permute.xlu0 %385
        %v387 = vadd.f32 %v386, %v232
        %v388 = vmax.f32 %v381, %v384
        %v389 = vmax.f32 %v388, %v387
        %v390 = vsub.f32 %v381, %v389
        %v391 = vmul.f32 %v390, 1.442695
        %v392 = vpow.pop %v391
        %v393 = vsub.f32 %v384, %v389
        %v394 = vmul.f32 %v393, 1.442695
        %v395 = vpow.pop %v394
        %v396 = vadd.f32 %v392, %v395
        %v397 = vsub.f32 %v387, %v389
        %v398 = vmul.f32 %v397, 1.442695
        %v399 = vpow.pop %v398
        %v400 = vadd.f32 %v396, %v399
        %v401 = vlog2.pop %v400
        %v402 = vmul.f32 %v401, 0.6931472
        %v403 = vadd.f32 %v389, %v402
        %s404 = scalar_lea.vmem %s214, 48
        %v405 = vld [vmem:[%s404] sm:$0xff]
        %v406 = vadd.f32 %v403, %v405
        %v407 = vmax.f32 %v406, -1e+30
        %408 = vst [vmem:[#allocation2] sm:$0xff] %v407
        %v409 = vld [vmem:[#allocation2] sm:$0xff]
        %410 = vrot.lane.b32.xlu0 %v409, 1
        %v411 = vpop.permute.xlu0 %410
        %v412 = vadd.f32 %v411, %v231
        %413 = vrot.lane.b32.xlu0 %v409, 2
        %v414 = vpop.permute.xlu0 %413
        %v415 = vadd.f32 %v414, %v232
        %v416 = vmax.f32 %v409, %v412
        %v417 = vmax.f32 %v416, %v415
        %v418 = vsub.f32 %v409, %v417
        %v419 = vmul.f32 %v418, 1.442695
        %v420 = vpow.pop %v419
        %v421 = vsub.f32 %v412, %v417
        %v422 = vmul.f32 %v421, 1.442695
        %v423 = vpow.pop %v422
        %v424 = vadd.f32 %v420, %v423
        %v425 = vsub.f32 %v415, %v417
        %v426 = vmul.f32 %v425, 1.442695
        %v427 = vpow.pop %v426
        %v428 = vadd.f32 %v424, %v427
        %v429 = vlog2.pop %v428
        %v430 = vmul.f32 %v429, 0.6931472
        %v431 = vadd.f32 %v417, %v430
        %s432 = scalar_lea.vmem %s214, 56
        %v433 = vld [vmem:[%s432] sm:$0xff]
        %v434 = vadd.f32 %v431, %v433
        %v435 = vmax.f32 %v434, -1e+30
        %436 = vst [vmem:[#allocation2] sm:$0xff] %v435
      $region36: #{ctc_forward.3} parent=31 // pred_fallthru
        _
      %p437 = scmp.gt.s32.totalorder %s19, 0
      // Predicated region
      $region37: #{ctc_forward.3} parent=31 // pred_check
        %p438 = pneg %p437
      $region38: #{ctc_forward.3} parent=31 // pred_check_branch
        %440 = sbr.rel (%p438) target = $region40
      $region39: #{ctc_forward.3} parent=31 // pred_region
        %v441 = vld [vmem:[#allocation2] sm:$0xff]
        %442 = vrot.lane.b32.xlu0 %v441, 1
        %v443 = vpop.permute.xlu0 %442
        %v444 = vadd.f32 %v443, %v231
        %445 = vrot.lane.b32.xlu0 %v441, 2
        %v446 = vpop.permute.xlu0 %445
        %v447 = vadd.f32 %v446, %v232
        %v448 = vmax.f32 %v441, %v444
        %v449 = vmax.f32 %v448, %v447
        %v450 = vsub.f32 %v441, %v449
        %v451 = vmul.f32 %v450, 1.442695
        %v452 = vpow.pop %v451
        %v453 = vsub.f32 %v444, %v449
        %v454 = vmul.f32 %v453, 1.442695
        %v455 = vpow.pop %v454
        %v456 = vadd.f32 %v452, %v455
        %v457 = vsub.f32 %v447, %v449
        %v458 = vmul.f32 %v457, 1.442695
        %v459 = vpow.pop %v458
        %v460 = vadd.f32 %v456, %v459
        %v461 = vlog2.pop %v460
        %v462 = vmul.f32 %v461, 0.6931472
        %v463 = vadd.f32 %v449, %v462
        %v464 = vld [vmem:[%s214] sm:$0xff]
        %v465 = vadd.f32 %v463, %v464
        %v466 = vmax.f32 %v465, -1e+30
        %467 = vst [vmem:[#allocation2] sm:$0xff] %v466
        %v468 = vld [vmem:[#allocation2] sm:$0xff]
        %469 = vrot.lane.b32.xlu0 %v468, 1
        %v470 = vpop.permute.xlu0 %469
        %v471 = vadd.f32 %v470, %v231
        %472 = vrot.lane.b32.xlu0 %v468, 2
        %v473 = vpop.permute.xlu0 %472
        %v474 = vadd.f32 %v473, %v232
        %v475 = vmax.f32 %v468, %v471
        %v476 = vmax.f32 %v475, %v474
        %v477 = vsub.f32 %v468, %v476
        %v478 = vmul.f32 %v477, 1.442695
        %v479 = vpow.pop %v478
        %v480 = vsub.f32 %v471, %v476
        %v481 = vmul.f32 %v480, 1.442695
        %v482 = vpow.pop %v481
        %v483 = vadd.f32 %v479, %v482
        %v484 = vsub.f32 %v474, %v476
        %v485 = vmul.f32 %v484, 1.442695
        %v486 = vpow.pop %v485
        %v487 = vadd.f32 %v483, %v486
        %v488 = vlog2.pop %v487
        %v489 = vmul.f32 %v488, 0.6931472
        %v490 = vadd.f32 %v476, %v489
        %s491 = scalar_lea.vmem %s214, 8
        %v492 = vld [vmem:[%s491] sm:$0xff]
        %v493 = vadd.f32 %v490, %v492
        %v494 = vmax.f32 %v493, -1e+30
        %495 = vst [vmem:[#allocation2] sm:$0xff] %v494
        %v496 = vld [vmem:[#allocation2] sm:$0xff]
        %497 = vrot.lane.b32.xlu0 %v496, 1
        %v498 = vpop.permute.xlu0 %497
        %v499 = vadd.f32 %v498, %v231
        %500 = vrot.lane.b32.xlu0 %v496, 2
        %v501 = vpop.permute.xlu0 %500
        %v502 = vadd.f32 %v501, %v232
        %v503 = vmax.f32 %v496, %v499
        %v504 = vmax.f32 %v503, %v502
        %v505 = vsub.f32 %v496, %v504
        %v506 = vmul.f32 %v505, 1.442695
        %v507 = vpow.pop %v506
        %v508 = vsub.f32 %v499, %v504
        %v509 = vmul.f32 %v508, 1.442695
        %v510 = vpow.pop %v509
        %v511 = vadd.f32 %v507, %v510
        %v512 = vsub.f32 %v502, %v504
        %v513 = vmul.f32 %v512, 1.442695
        %v514 = vpow.pop %v513
        %v515 = vadd.f32 %v511, %v514
        %v516 = vlog2.pop %v515
        %v517 = vmul.f32 %v516, 0.6931472
        %v518 = vadd.f32 %v504, %v517
        %s519 = scalar_lea.vmem %s214, 16
        %v520 = vld [vmem:[%s519] sm:$0xff]
        %v521 = vadd.f32 %v518, %v520
        %v522 = vmax.f32 %v521, -1e+30
        %523 = vst [vmem:[#allocation2] sm:$0xff] %v522
        %v524 = vld [vmem:[#allocation2] sm:$0xff]
        %525 = vrot.lane.b32.xlu0 %v524, 1
        %v526 = vpop.permute.xlu0 %525
        %v527 = vadd.f32 %v526, %v231
        %528 = vrot.lane.b32.xlu0 %v524, 2
        %v529 = vpop.permute.xlu0 %528
        %v530 = vadd.f32 %v529, %v232
        %v531 = vmax.f32 %v524, %v527
        %v532 = vmax.f32 %v531, %v530
        %v533 = vsub.f32 %v524, %v532
        %v534 = vmul.f32 %v533, 1.442695
        %v535 = vpow.pop %v534
        %v536 = vsub.f32 %v527, %v532
        %v537 = vmul.f32 %v536, 1.442695
        %v538 = vpow.pop %v537
        %v539 = vadd.f32 %v535, %v538
        %v540 = vsub.f32 %v530, %v532
        %v541 = vmul.f32 %v540, 1.442695
        %v542 = vpow.pop %v541
        %v543 = vadd.f32 %v539, %v542
        %v544 = vlog2.pop %v543
        %v545 = vmul.f32 %v544, 0.6931472
        %v546 = vadd.f32 %v532, %v545
        %s547 = scalar_lea.vmem %s214, 24
        %v548 = vld [vmem:[%s547] sm:$0xff]
        %v549 = vadd.f32 %v546, %v548
        %v550 = vmax.f32 %v549, -1e+30
        %551 = vst [vmem:[#allocation2] sm:$0xff] %v550
        %v552 = vld [vmem:[#allocation2] sm:$0xff]
        %553 = vrot.lane.b32.xlu0 %v552, 1
        %v554 = vpop.permute.xlu0 %553
        %v555 = vadd.f32 %v554, %v231
        %556 = vrot.lane.b32.xlu0 %v552, 2
        %v557 = vpop.permute.xlu0 %556
        %v558 = vadd.f32 %v557, %v232
        %v559 = vmax.f32 %v552, %v555
        %v560 = vmax.f32 %v559, %v558
        %v561 = vsub.f32 %v552, %v560
        %v562 = vmul.f32 %v561, 1.442695
        %v563 = vpow.pop %v562
        %v564 = vsub.f32 %v555, %v560
        %v565 = vmul.f32 %v564, 1.442695
        %v566 = vpow.pop %v565
        %v567 = vadd.f32 %v563, %v566
        %v568 = vsub.f32 %v558, %v560
        %v569 = vmul.f32 %v568, 1.442695
        %v570 = vpow.pop %v569
        %v571 = vadd.f32 %v567, %v570
        %v572 = vlog2.pop %v571
        %v573 = vmul.f32 %v572, 0.6931472
        %v574 = vadd.f32 %v560, %v573
        %s575 = scalar_lea.vmem %s214, 32
        %v576 = vld [vmem:[%s575] sm:$0xff]
        %v577 = vadd.f32 %v574, %v576
        %v578 = vmax.f32 %v577, -1e+30
        %579 = vst [vmem:[#allocation2] sm:$0xff] %v578
        %v580 = vld [vmem:[#allocation2] sm:$0xff]
        %581 = vrot.lane.b32.xlu0 %v580, 1
        %v582 = vpop.permute.xlu0 %581
        %v583 = vadd.f32 %v582, %v231
        %584 = vrot.lane.b32.xlu0 %v580, 2
        %v585 = vpop.permute.xlu0 %584
        %v586 = vadd.f32 %v585, %v232
        %v587 = vmax.f32 %v580, %v583
        %v588 = vmax.f32 %v587, %v586
        %v589 = vsub.f32 %v580, %v588
        %v590 = vmul.f32 %v589, 1.442695
        %v591 = vpow.pop %v590
        %v592 = vsub.f32 %v583, %v588
        %v593 = vmul.f32 %v592, 1.442695
        %v594 = vpow.pop %v593
        %v595 = vadd.f32 %v591, %v594
        %v596 = vsub.f32 %v586, %v588
        %v597 = vmul.f32 %v596, 1.442695
        %v598 = vpow.pop %v597
        %v599 = vadd.f32 %v595, %v598
        %v600 = vlog2.pop %v599
        %v601 = vmul.f32 %v600, 0.6931472
        %v602 = vadd.f32 %v588, %v601
        %s603 = scalar_lea.vmem %s214, 40
        %v604 = vld [vmem:[%s603] sm:$0xff]
        %v605 = vadd.f32 %v602, %v604
        %v606 = vmax.f32 %v605, -1e+30
        %607 = vst [vmem:[#allocation2] sm:$0xff] %v606
        %v608 = vld [vmem:[#allocation2] sm:$0xff]
        %609 = vrot.lane.b32.xlu0 %v608, 1
        %v610 = vpop.permute.xlu0 %609
        %v611 = vadd.f32 %v610, %v231
        %612 = vrot.lane.b32.xlu0 %v608, 2
        %v613 = vpop.permute.xlu0 %612
        %v614 = vadd.f32 %v613, %v232
        %v615 = vmax.f32 %v608, %v611
        %v616 = vmax.f32 %v615, %v614
        %v617 = vsub.f32 %v608, %v616
        %v618 = vmul.f32 %v617, 1.442695
        %v619 = vpow.pop %v618
        %v620 = vsub.f32 %v611, %v616
        %v621 = vmul.f32 %v620, 1.442695
        %v622 = vpow.pop %v621
        %v623 = vadd.f32 %v619, %v622
        %v624 = vsub.f32 %v614, %v616
        %v625 = vmul.f32 %v624, 1.442695
        %v626 = vpow.pop %v625
        %v627 = vadd.f32 %v623, %v626
        %v628 = vlog2.pop %v627
        %v629 = vmul.f32 %v628, 0.6931472
        %v630 = vadd.f32 %v616, %v629
        %s631 = scalar_lea.vmem %s214, 48
        %v632 = vld [vmem:[%s631] sm:$0xff]
        %v633 = vadd.f32 %v630, %v632
        %v634 = vmax.f32 %v633, -1e+30
        %635 = vst [vmem:[#allocation2] sm:$0xff] %v634
        %v636 = vld [vmem:[#allocation2] sm:$0xff]
        %637 = vrot.lane.b32.xlu0 %v636, 1
        %v638 = vpop.permute.xlu0 %637
        %v639 = vadd.f32 %v638, %v231
        %640 = vrot.lane.b32.xlu0 %v636, 2
        %v641 = vpop.permute.xlu0 %640
        %v642 = vadd.f32 %v641, %v232
        %v643 = vmax.f32 %v636, %v639
        %v644 = vmax.f32 %v643, %v642
        %v645 = vsub.f32 %v636, %v644
        %v646 = vmul.f32 %v645, 1.442695
        %v647 = vpow.pop %v646
        %v648 = vsub.f32 %v639, %v644
        %v649 = vmul.f32 %v648, 1.442695
        %v650 = vpow.pop %v649
        %v651 = vadd.f32 %v647, %v650
        %v652 = vsub.f32 %v642, %v644
        %v653 = vmul.f32 %v652, 1.442695
        %v654 = vpow.pop %v653
        %v655 = vadd.f32 %v651, %v654
        %v656 = vlog2.pop %v655
        %v657 = vmul.f32 %v656, 0.6931472
        %v658 = vadd.f32 %v644, %v657
        %s659 = scalar_lea.vmem %s214, 56
        %v660 = vld [vmem:[%s659] sm:$0xff]
        %v661 = vadd.f32 %v658, %v660
        %v662 = vmax.f32 %v661, -1e+30
        %663 = vst [vmem:[#allocation2] sm:$0xff] %v662
      $region40: #{ctc_forward.3} parent=31 // pred_fallthru
        _
      %p664 = scmp.eq.s32.totalorder %s19, 1
      // Predicated region
      $region41: #{ctc_forward.3} parent=31 // pred_check
        %p665 = pneg %p664
      $region42: #{ctc_forward.3} parent=31 // pred_check_branch
        %667 = sbr.rel (%p665) target = $region44
      $region43: #{ctc_forward.3} parent=31 // pred_region
        %v668 = vld [vmem:[#allocation2] sm:$0xff]
        %v669 = vld [vmem:[%s223] sm:$0xff]
        %v670 = vadd.f32 %v668, %v669
        %671 = vmax.xlane.f32.xlu0 %v670
        %v672 = vpop.xlane.xlu0 %671
        %v673 = vsub.f32 %v670, %v672
        %v674 = vmul.f32 %v673, 1.442695
        %v675 = vpow.pop %v674
        %676 = vadd.xlane.f32.xlu0 %v675
        %v677 = vpop.xlane.xlu0 %676
        %v678 = vlog2.pop %v677
        %v679 = vmul.f32 %v678, 0.6931472
        %v680 = vadd.f32 %v672, %v679
        %vm681 = vcmp.lt.f32.partialorder %v680, -5e+29
        %v682 = vsub.f32 0.0, %v680
        %v683 = vsel %vm681, 0.0, %v682
        %684 = vst [vmem:[%s227] sm:$0xff] %v683
      $region44: #{ctc_forward.3} parent=31 // pred_fallthru
        _
      %p685 = scmp.lt.s32.totalorder %s18, 0
      %s686 = scalar_select %p685, %s18, 0
      %s687 = smul.addr %s686, 8
      %s688 = scalar_lea.vmem %s3, %s687
      // Predicated region
      $region45: #{ctc_forward.3} parent=31 // pred_check
        %p689 = pneg %p124
      $region46: #{ctc_forward.3} parent=31 // pred_check_branch
        %691 = sbr.rel (%p689) target = $region48
      $region47: #{ctc_forward.3} parent=31 // pred_region
        _
      $region48: #{ctc_forward.3} parent=31 // pred_fallthru
        _
      // Predicated region
      $region49: #{ctc_forward.3} parent=31 // pred_check
        %p692 = pneg %p124
      $region50: #{ctc_forward.3} parent=31 // pred_check_branch
        %694 = sbr.rel (%p692) target = $region52
      $region51: #{ctc_forward.3} parent=31 // pred_region
        %p695 = scmp.lt.s32.totalorder %s18, 0
        %s696 = scalar_select %p695, %s18, 0
        %s697 = smul.addr %s696, 8
        %s698 = scalar_lea.vmem %s3, %s697
      $region52: #{ctc_forward.3} parent=31 // pred_fallthru
        _
    $region32: #{ctc_forward.3} parent=5 // pred_fallthru
      _
    %p699 = scmp.le.s32.totalorder 2, %s9
    // Predicated region
    $region53: #{ctc_forward.3} parent=5 // pred_check
      %p700 = pneg %p699
    $region54: #{ctc_forward.3} parent=5 // pred_check_branch
      %702 = sbr.rel (%p700) target = $region56
    $region55: #{ctc_forward.3} parent=5 // pred_region
      %s703 = ssub.s32 %s9, 2
    $region56: #{ctc_forward.3} parent=5 // pred_fallthru
      _
  $region6: #{ctc_forward.3} parent=0 // loop_footer
    %s13 = sadd.s32 1, %s9
  $region7: #{ctc_forward.3} parent=0 // loop_footer_branch
    %8 = sbr.rel target = $region3
  $region8: #{ctc_forward.3} parent=0 // loop_exit
    _

</llo_original>
